<compile_context>
chip_gen: v6e
topology: v6e:2x2x1
jax: 0.10.0
libtpu: 0.0.40
codegen_flags: <defaults>
</compile_context>

<pallas_src>
import jax
import jax.numpy as jnp
from jax.experimental import pallas as pl
from jax.experimental.pallas import tpu as pltpu

IN_DIM = 28 * 28 * 3      # 2352
H1 = 128
H2 = 64
OUT = 10
OUT_PAD = 128             # lane-dense padded output width


def mlp_kernel(x_ref, w1_ref, b1_ref, w2_ref, b2_ref, w3_ref, b3_ref, o_ref):
    # One (tb, IN_DIM) f32 batch tile per grid step; weights stay resident in VMEM.
    x = x_ref[...].astype(jnp.bfloat16)                                # (tb, IN_DIM) bf16
    h1 = jnp.dot(x, w1_ref[...], preferred_element_type=jnp.float32) + b1_ref[...]
    h1 = jnp.maximum(h1, 0.0).astype(jnp.bfloat16)                     # (tb, H1)
    h2 = jnp.dot(h1, w2_ref[...], preferred_element_type=jnp.float32) + b2_ref[...]
    h2 = jnp.maximum(h2, 0.0).astype(jnp.bfloat16)                     # (tb, H2)
    o_ref[...] = (jnp.dot(h2, w3_ref[...], preferred_element_type=jnp.float32)
                  + b3_ref[...])                                       # f32 (tb, OUT_PAD)


def prepare_params(params):
    """One-time weight prep, hoisted out of the forward hot path."""
    w1, b1, w2, b2, w3, b3 = params                  # f32, (in, out) layout, biases (1, out)
    w1_p = w1.astype(jnp.bfloat16)                                       # (IN_DIM, H1)
    w2_p = w2.astype(jnp.bfloat16)                                       # (H1, H2)
    w3_p = jnp.pad(w3, ((0, 0), (0, OUT_PAD - OUT))).astype(jnp.bfloat16)  # (H2, OUT_PAD)
    b3_p = jnp.pad(b3, ((0, 0), (0, OUT_PAD - OUT)))                     # (1, OUT_PAD) f32
    return (w1_p, b1, w2_p, b2, w3_p, b3_p)


def _choose_tb(batch, tb_max):
    tb_max = max(8, (tb_max // 8) * 8)     # keep tile a multiple of 8 (f32 sublane)
    if batch <= tb_max:
        return batch                       # single full-batch tile (full-dim block is legal)
    return tb_max


def simple_nn_forward(x_nchw, prepared, tb_max=512):
    """prepared = prepare_params(params).  tb_max=512 fits v5e; v6e/v7x may use 1024."""
    w1_p, b1, w2_p, b2, w3_p, b3_p = prepared
    B = x_nchw.shape[0]

    # Flatten NCHW -> (B, C*H*W); identical element ordering to torch's .view(-1, 3*28*28).
    x_flat = x_nchw.reshape(B, IN_DIM)

    tb = _choose_tb(B, tb_max)
    grid = (pl.cdiv(B, tb),)

    # Resident (never re-DMA'd across batch tiles) full-array spec for weights/biases.
    resident = lambda shape: pl.BlockSpec(shape, lambda i: (0, 0))

    cost = pl.CostEstimate(
        flops=2 * B * (IN_DIM * H1 + H1 * H2 + H2 * OUT_PAD),
        transcendentals=0,
        bytes_accessed=(4 * B * IN_DIM                                   # x (f32)
                        + 2 * (IN_DIM * H1 + H1 * H2 + H2 * OUT_PAD)     # weights (bf16)
                        + 4 * (H1 + H2 + OUT_PAD)                        # biases (f32)
                        + 4 * B * OUT_PAD))                              # output (f32)

    out = pl.pallas_call(
        mlp_kernel,
        out_shape=jax.ShapeDtypeStruct((B, OUT_PAD), jnp.float32),
        grid=grid,
        in_specs=[
            pl.BlockSpec((tb, IN_DIM), lambda i: (i, 0)),   # x: tiled over batch, f32
            resident((IN_DIM, H1)),                         # w1 (bf16)
            resident((1, H1)),                              # b1 (f32)
            resident((H1, H2)),                             # w2 (bf16)
            resident((1, H2)),                              # b2 (f32)
            resident((H2, OUT_PAD)),                        # w3 (bf16, lane-padded)
            resident((1, OUT_PAD)),                         # b3 (f32, lane-padded)
        ],
        out_specs=pl.BlockSpec((tb, OUT_PAD), lambda i: (i, 0)),
        compiler_params=pltpu.CompilerParams(
            dimension_semantics=("parallel",)),             # 2 TCs on v7x; no-op on v5e/v6e
        cost_estimate=cost,
    )(x_flat, w1_p, b1, w2_p, b2, w3_p, b3_p)

    # Strip lane padding (fold this slice into the consumer in real pipelines).
    return out[:, :OUT]


def init_params(key):
    # Deterministic synthetic init (Kaiming-uniform-ish like torch Linear default).
    ks = jax.random.split(key, 6)

    def linear(kw, kb, fan_in, fan_out):
        bound = 1.0 / jnp.sqrt(fan_in)
        w = jax.random.uniform(kw, (fan_in, fan_out), jnp.float32, -bound, bound)
        b = jax.random.uniform(kb, (1, fan_out), jnp.float32, -bound, bound)
        return w, b

    w1, b1 = linear(ks[0], ks[1], IN_DIM, H1)
    w2, b2 = linear(ks[2], ks[3], H1, H2)
    w3, b3 = linear(ks[4], ks[5], H2, OUT)
    return (w1, b1, w2, b2, w3, b3)


if __name__ == "__main__":
    key = jax.random.PRNGKey(0)
    k_x, k_p = jax.random.split(key)
    B = 2
    x = jax.random.normal(k_x, (B, 3, 28, 28), dtype=jnp.float32)
    params = init_params(k_p)
    prepared = prepare_params(params)

    out = simple_nn_forward(x, prepared)
    out = jax.block_until_ready(out)

    # Reference check in plain f32 JAX (kernel uses bf16 matmul inputs with f32
    # accumulation, so tolerance is loosened accordingly).
    w1, b1, w2, b2, w3, b3 = params
    xf = x.reshape(B, IN_DIM)
    ref = jnp.maximum(xf @ w1 + b1, 0.0)
    ref = jnp.maximum(ref @ w2 + b2, 0.0)
    ref = ref @ w3 + b3

    assert out.shape == (B, OUT)
    assert jnp.allclose(out, ref, atol=3e-2, rtol=3e-2), (
        f"max abs err {jnp.max(jnp.abs(out - ref))}")

    print("KERNEL_OK")
</pallas_src>

<mosaic_0001>
module attributes {stable_mosaic.version = 11 : i64} {
  func.func @mlp_kernel(%arg0: i32, %arg1: memref<2x2352xf32, #tpu.memory_space<vmem>>, %arg2: memref<2352x128xbf16, #tpu.memory_space<vmem>>, %arg3: memref<1x128xf32, #tpu.memory_space<vmem>>, %arg4: memref<128x64xbf16, #tpu.memory_space<vmem>>, %arg5: memref<1x64xf32, #tpu.memory_space<vmem>>, %arg6: memref<64x128xbf16, #tpu.memory_space<vmem>>, %arg7: memref<1x128xf32, #tpu.memory_space<vmem>>, %arg8: memref<2x128xf32, #tpu.memory_space<vmem>>) attributes {dimension_semantics = [#tpu.dimension_semantics<parallel>], iteration_bounds = array<i64: 1>, scalar_prefetch = 0 : i64, scratch_operands = 0 : i64, tpu.core_type = #tpu.core_type<tc>, window_params = [{transform_indices = @transform_0, window_bounds = array<i64: 2, 2352>}, {pipeline_mode = #tpu.pipeline_mode<synchronous>, transform_indices = @transform_1, window_bounds = array<i64: 2352, 128>}, {pipeline_mode = #tpu.pipeline_mode<synchronous>, transform_indices = @transform_2, window_bounds = array<i64: 1, 128>}, {pipeline_mode = #tpu.pipeline_mode<synchronous>, transform_indices = @transform_3, window_bounds = array<i64: 128, 64>}, {pipeline_mode = #tpu.pipeline_mode<synchronous>, transform_indices = @transform_4, window_bounds = array<i64: 1, 64>}, {pipeline_mode = #tpu.pipeline_mode<synchronous>, transform_indices = @transform_5, window_bounds = array<i64: 64, 128>}, {pipeline_mode = #tpu.pipeline_mode<synchronous>, transform_indices = @transform_6, window_bounds = array<i64: 1, 128>}, {transform_indices = @transform_7, window_bounds = array<i64: 2, 128>}]} {
    %c0 = arith.constant 0 : index
    %c0_0 = arith.constant 0 : index
    %0 = vector.load %arg1[%c0, %c0_0] : memref<2x2352xf32, #tpu.memory_space<vmem>>, vector<2x2352xf32>
    %1 = arith.truncf %0 : vector<2x2352xf32> to vector<2x2352xbf16>
    %c0_1 = arith.constant 0 : index
    %c0_2 = arith.constant 0 : index
    %2 = vector.load %arg2[%c0_1, %c0_2] : memref<2352x128xbf16, #tpu.memory_space<vmem>>, vector<2352x128xbf16>
    %cst = arith.constant dense<0.000000e+00> : vector<2x128xf32>
    %3 = tpu.matmul %1, %2, %cst {dimension_numbers = #tpu.dot_dimension_numbers<[1], [0], [0], [1], [0, 0, 1, 1], [], []>} : vector<2x2352xbf16>, vector<2352x128xbf16>, vector<2x128xf32> -> vector<2x128xf32>
    %c0_3 = arith.constant 0 : index
    %c0_4 = arith.constant 0 : index
    %4 = vector.load %arg3[%c0_3, %c0_4] : memref<1x128xf32, #tpu.memory_space<vmem>>, vector<1x128xf32>
    %5 = vector.broadcast %4 : vector<1x128xf32> to vector<2x128xf32>
    %6 = arith.addf %3, %5 : vector<2x128xf32>
    %cst_5 = arith.constant 0.000000e+00 : f32
    %7 = vector.broadcast %cst_5 : f32 to vector<2x128xf32>
    %8 = arith.maximumf %6, %7 : vector<2x128xf32>
    %9 = arith.truncf %8 : vector<2x128xf32> to vector<2x128xbf16>
    %c0_6 = arith.constant 0 : index
    %c0_7 = arith.constant 0 : index
    %10 = vector.load %arg4[%c0_6, %c0_7] : memref<128x64xbf16, #tpu.memory_space<vmem>>, vector<128x64xbf16>
    %cst_8 = arith.constant dense<0.000000e+00> : vector<2x64xf32>
    %11 = tpu.matmul %9, %10, %cst_8 {dimension_numbers = #tpu.dot_dimension_numbers<[1], [0], [0], [1], [0, 0, 1, 1], [], []>} : vector<2x128xbf16>, vector<128x64xbf16>, vector<2x64xf32> -> vector<2x64xf32>
    %c0_9 = arith.constant 0 : index
    %c0_10 = arith.constant 0 : index
    %12 = vector.load %arg5[%c0_9, %c0_10] : memref<1x64xf32, #tpu.memory_space<vmem>>, vector<1x64xf32>
    %13 = vector.broadcast %12 : vector<1x64xf32> to vector<2x64xf32>
    %14 = arith.addf %11, %13 : vector<2x64xf32>
    %cst_11 = arith.constant 0.000000e+00 : f32
    %15 = vector.broadcast %cst_11 : f32 to vector<2x64xf32>
    %16 = arith.maximumf %14, %15 : vector<2x64xf32>
    %17 = arith.truncf %16 : vector<2x64xf32> to vector<2x64xbf16>
    %c0_12 = arith.constant 0 : index
    %c0_13 = arith.constant 0 : index
    %18 = vector.load %arg6[%c0_12, %c0_13] : memref<64x128xbf16, #tpu.memory_space<vmem>>, vector<64x128xbf16>
    %cst_14 = arith.constant dense<0.000000e+00> : vector<2x128xf32>
    %19 = tpu.matmul %17, %18, %cst_14 {dimension_numbers = #tpu.dot_dimension_numbers<[1], [0], [0], [1], [0, 0, 1, 1], [], []>} : vector<2x64xbf16>, vector<64x128xbf16>, vector<2x128xf32> -> vector<2x128xf32>
    %c0_15 = arith.constant 0 : index
    %c0_16 = arith.constant 0 : index
    %20 = vector.load %arg7[%c0_15, %c0_16] : memref<1x128xf32, #tpu.memory_space<vmem>>, vector<1x128xf32>
    %21 = vector.broadcast %20 : vector<1x128xf32> to vector<2x128xf32>
    %22 = arith.addf %19, %21 : vector<2x128xf32>
    %c0_17 = arith.constant 0 : index
    %c0_18 = arith.constant 0 : index
    %23 = vector.load %arg8[%c0_17, %c0_18] : memref<2x128xf32, #tpu.memory_space<vmem>>, vector<2x128xf32>
    tpu.vector_store %arg8[%c0_17, %c0_18], %22 {strides = array<i32>} : memref<2x128xf32, #tpu.memory_space<vmem>>, vector<2x128xf32>,
    return
  }
  func.func @transform_0(%arg0: i32) -> (i32, i32) {
    %c0_i32 = arith.constant 0 : i32
    %c0_i32_0 = arith.constant 0 : i32
    return %arg0, %c0_i32 : i32, i32
  }
  func.func @transform_1(%arg0: i32) -> (i32, i32) {
    %c0_i32 = arith.constant 0 : i32
    %c0_i32_0 = arith.constant 0 : i32
    %c0_i32_1 = arith.constant 0 : i32
    return %c0_i32, %c0_i32_0 : i32, i32
  }
  func.func @transform_2(%arg0: i32) -> (i32, i32) {
    %c0_i32 = arith.constant 0 : i32
    %c0_i32_0 = arith.constant 0 : i32
    %c0_i32_1 = arith.constant 0 : i32
    return %c0_i32, %c0_i32_0 : i32, i32
  }
  func.func @transform_3(%arg0: i32) -> (i32, i32) {
    %c0_i32 = arith.constant 0 : i32
    %c0_i32_0 = arith.constant 0 : i32
    %c0_i32_1 = arith.constant 0 : i32
    return %c0_i32, %c0_i32_0 : i32, i32
  }
  func.func @transform_4(%arg0: i32) -> (i32, i32) {
    %c0_i32 = arith.constant 0 : i32
    %c0_i32_0 = arith.constant 0 : i32
    %c0_i32_1 = arith.constant 0 : i32
    return %c0_i32, %c0_i32_0 : i32, i32
  }
  func.func @transform_5(%arg0: i32) -> (i32, i32) {
    %c0_i32 = arith.constant 0 : i32
    %c0_i32_0 = arith.constant 0 : i32
    %c0_i32_1 = arith.constant 0 : i32
    return %c0_i32, %c0_i32_0 : i32, i32
  }
  func.func @transform_6(%arg0: i32) -> (i32, i32) {
    %c0_i32 = arith.constant 0 : i32
    %c0_i32_0 = arith.constant 0 : i32
    %c0_i32_1 = arith.constant 0 : i32
    return %c0_i32, %c0_i32_0 : i32, i32
  }
  func.func @transform_7(%arg0: i32) -> (i32, i32) {
    %c0_i32 = arith.constant 0 : i32
    %c0_i32_0 = arith.constant 0 : i32
    return %arg0, %c0_i32 : i32, i32
  }
}

</mosaic_0001>

<llo_original>
// kernel: tpu_custom_call.1
$region0: #{tpu_custom_call.1}
  #allocation0 [shape = 'u32[]', space=smem, size = 0x4, offset = 0x4, fixed_abs, tag = 'smem constant byte address 0x4 - core index']
  #allocation1 [shape = 'u32[144,128]{1,0:T(1,128)}', space=vmem, size = 0x12000, scoped, tag = 'internal scratch']
  %s0 = inlined_call_operand.vmem [shape: f32[2,2352], index: 0, kind: input, shape index: {}]
  %s1 = inlined_call_operand.hbm [shape: bf16[2352,128], index: 1, kind: input, shape index: {}]
  %s2 = inlined_call_operand.vmem [shape: f32[1,128], index: 2, kind: input, shape index: {}]
  %s3 = inlined_call_operand.vmem [shape: bf16[128,64], index: 3, kind: input, shape index: {}]
  %s4 = inlined_call_operand.vmem [shape: f32[1,64], index: 4, kind: input, shape index: {}]
  %s5 = inlined_call_operand.vmem [shape: bf16[64,128], index: 5, kind: input, shape index: {}]
  %s6 = inlined_call_operand.vmem [shape: f32[1,128], index: 6, kind: input, shape index: {}]
  %s7 = inlined_call_operand.hbm [shape: f32[2,128], index: 7, kind: output, shape index: {}]
  %s8 = sld [smem:[#allocation0]]
  $region42: #{tpu_custom_call.1} parent=0
    _
  %s10 = ssub.s32 1, %s8
  %s11 = scalar_select 0, %s10, %s8
  $region1: #{tpu_custom_call.1} parent=0
    #allocation2 [shape = 'u8[602112]{0}', space=vmem, size = 0x93000, scoped, tag = 'input window, operand 1, single buffered']
    #allocation3 [shape = 's32[1]{0}', space=sflag, size = 0x4, scoped, tag = 'scoped memory for tpu_custom_call.1']
    #allocation4 [shape = 's32[1]{0}', space=sflag, size = 0x4, scoped, tag = 'scoped memory for tpu_custom_call.1']
    #allocation5 [shape = 'u8[1024]{0}', space=vmem, size = 0x400, scoped, tag = 'output window, operand 0, single buffered']
    %12 = vsyncpa [#allocation3], 0
    %13 = vsyncpa [#allocation4], 0
    // Predicated region
    $region2: #{tpu_custom_call.1} parent=1 // pred_check
      _
    $region3: #{tpu_custom_call.1} parent=1 // pred_check_branch
      %15 = sbr.rel (0) target = $region5
    $region4: #{tpu_custom_call.1} parent=1 // pred_region
      _
    $region5: #{tpu_custom_call.1} parent=1 // pred_fallthru
      _
    // Predicated region
    $region6: #{tpu_custom_call.1} parent=1 // pred_check
      _
    $region7: #{tpu_custom_call.1} parent=1 // pred_check_branch
      %17 = sbr.rel (0) target = $region9
    $region8: #{tpu_custom_call.1} parent=1 // pred_region
      %s19 = ssub.s32 18816, 18816
      %20 = vsyncadd [#allocation3], %s19
      %s21 = sshll.u32 [#allocation2], 4
      %s22 = int_to_ptr.vmem [resolvable:$true] %s21
      %27 = dma.hbm_to_vmem [thread:$0]  %s1, 18816, %s22, [#allocation3], 64, 64, 4
    $region9: #{tpu_custom_call.1} parent=1 // pred_fallthru
      _
    // Predicated region
    $region10: #{tpu_custom_call.1} parent=1 // pred_check
      _
    $region11: #{tpu_custom_call.1} parent=1 // pred_check_branch
      %29 = sbr.rel (0) target = $region13
    $region12: #{tpu_custom_call.1} parent=1 // pred_region
      _
    $region13: #{tpu_custom_call.1} parent=1 // pred_fallthru
      _
    // Predicated region
    $region14: #{tpu_custom_call.1} parent=1 // pred_check
      _
    $region15: #{tpu_custom_call.1} parent=1 // pred_check_branch
      %31 = sbr.rel (0) target = $region17
    $region16: #{tpu_custom_call.1} parent=1 // pred_region
      _
    $region17: #{tpu_custom_call.1} parent=1 // pred_fallthru
      _
    // Predicated region
    $region18: #{tpu_custom_call.1} parent=1 // pred_check
      _
    $region19: #{tpu_custom_call.1} parent=1 // pred_check_branch
      %33 = sbr.rel (0) target = $region21
    $region20: #{tpu_custom_call.1} parent=1 // pred_region
      _
    $region21: #{tpu_custom_call.1} parent=1 // pred_fallthru
      _
    // Predicated region
    $region22: #{tpu_custom_call.1} parent=1 // pred_check
      _
    $region23: #{tpu_custom_call.1} parent=1 // pred_check_branch
      %35 = sbr.rel (0) target = $region25
    $region24: #{tpu_custom_call.1} parent=1 // pred_region
      _
    $region25: #{tpu_custom_call.1} parent=1 // pred_fallthru
      _
    // Predicated region
    $region26: #{tpu_custom_call.1} parent=1 // pred_check
      _
    $region27: #{tpu_custom_call.1} parent=1 // pred_check_branch
      %37 = sbr.rel (0) target = $region29
    $region28: #{tpu_custom_call.1} parent=1 // pred_region
      _
    $region29: #{tpu_custom_call.1} parent=1 // pred_fallthru
      _
    // Predicated region
    $region30: #{tpu_custom_call.1} parent=1 // pred_check
      _
    $region31: #{tpu_custom_call.1} parent=1 // pred_check_branch
      %39 = sbr.rel (0) target = $region33
    $region32: #{tpu_custom_call.1} parent=1 // pred_region
      %40 = dma.done [#allocation3], 18816
    $region33: #{tpu_custom_call.1} parent=1 // pred_fallthru
      _
    %v42 = vld [vmem:[%s0] sm:$0xff]
    %v43 = vld [vmem:[%s0 + $0x8] sm:$0xff]
    %v44 = vld [vmem:[%s0 + $0x10] sm:$0xff]
    %v45 = vld [vmem:[%s0 + $0x18] sm:$0xff]
    %v46 = vld [vmem:[%s0 + $0x20] sm:$0x3f]
    %v52 = vcombine.high %v42, %v42
    %v54 = vunpack.c.l.s4 1983009808
    %v55 = vunpack.c.0.s8 %v54
    %v56 = vlaneseq
    %v57 = vshrl.u32 %v56, 7
    %v58 = vsub.s32 %v55, %v57
    %v59 = vrot.slane %v42, %v58
    %v61 = vunpack.c.l.s4 1983009808
    %v62 = vunpack.c.0.s8 %v61
    %v63 = vlaneseq
    %v64 = vshrl.u32 %v63, 7
    %v65 = vsub.s32 %v62, %v64
    %v66 = vrot.slane %v52, %v65
    %v67 = vcombine.high %v59, %v59
    %v68 = vcombine.high %v66, %v66
    %v69 = vcombine.high %v43, %v43
    %v71 = vunpack.c.l.s4 1983009808
    %v72 = vunpack.c.0.s8 %v71
    %v73 = vlaneseq
    %v74 = vshrl.u32 %v73, 7
    %v75 = vsub.s32 %v72, %v74
    %v76 = vrot.slane %v43, %v75
    %v78 = vunpack.c.l.s4 1983009808
    %v79 = vunpack.c.0.s8 %v78
    %v80 = vlaneseq
    %v81 = vshrl.u32 %v80, 7
    %v82 = vsub.s32 %v79, %v81
    %v83 = vrot.slane %v69, %v82
    %v84 = vcombine.high %v76, %v76
    %v85 = vcombine.high %v83, %v83
    %v86 = vcombine.high %v44, %v44
    %v88 = vunpack.c.l.s4 1983009808
    %v89 = vunpack.c.0.s8 %v88
    %v90 = vlaneseq
    %v91 = vshrl.u32 %v90, 7
    %v92 = vsub.s32 %v89, %v91
    %v93 = vrot.slane %v44, %v92
    %v95 = vunpack.c.l.s4 1983009808
    %v96 = vunpack.c.0.s8 %v95
    %v97 = vlaneseq
    %v98 = vshrl.u32 %v97, 7
    %v99 = vsub.s32 %v96, %v98
    %v100 = vrot.slane %v86, %v99
    %v101 = vcombine.high %v93, %v93
    %v102 = vcombine.high %v100, %v100
    %v103 = vcombine.high %v45, %v45
    %v105 = vunpack.c.l.s4 1983009808
    %v106 = vunpack.c.0.s8 %v105
    %v107 = vlaneseq
    %v108 = vshrl.u32 %v107, 7
    %v109 = vsub.s32 %v106, %v108
    %v110 = vrot.slane %v45, %v109
    %v112 = vunpack.c.l.s4 1983009808
    %v113 = vunpack.c.0.s8 %v112
    %v114 = vlaneseq
    %v115 = vshrl.u32 %v114, 7
    %v116 = vsub.s32 %v113, %v115
    %v117 = vrot.slane %v103, %v116
    %v118 = vcombine.high %v110, %v110
    %v119 = vcombine.high %v117, %v117
    %v120 = vcombine.high %v46, %v46
    %v122 = vunpack.c.l.s4 1983009808
    %v123 = vunpack.c.0.s8 %v122
    %v124 = vlaneseq
    %v125 = vshrl.u32 %v124, 7
    %v126 = vsub.s32 %v123, %v125
    %v127 = vrot.slane %v46, %v126
    %v129 = vunpack.c.l.s4 1983009808
    %v130 = vunpack.c.0.s8 %v129
    %v131 = vlaneseq
    %v132 = vshrl.u32 %v131, 7
    %v133 = vsub.s32 %v130, %v132
    %v134 = vrot.slane %v120, %v133
    %v135 = vcombine.high %v127, %v127
    %v155 = vpack.c.bf16 %v59, %v59
    %v156 = vpack.c.bf16 %v67, %v67
    %v157 = vpack.c.bf16 %v66, %v66
    %v158 = vpack.c.bf16 %v68, %v68
    %v159 = vpack.c.bf16 %v76, %v76
    %v160 = vpack.c.bf16 %v84, %v84
    %v161 = vpack.c.bf16 %v83, %v83
    %v162 = vpack.c.bf16 %v85, %v85
    %v163 = vpack.c.bf16 %v93, %v93
    %v164 = vpack.c.bf16 %v101, %v101
    %v165 = vpack.c.bf16 %v100, %v100
    %v166 = vpack.c.bf16 %v102, %v102
    %v167 = vpack.c.bf16 %v110, %v110
    %v168 = vpack.c.bf16 %v118, %v118
    %v169 = vpack.c.bf16 %v117, %v117
    %v170 = vpack.c.bf16 %v119, %v119
    %v171 = vpack.c.bf16 %v127, %v127
    %v172 = vpack.c.bf16 %v135, %v135
    %v173 = vpack.c.bf16 %v134, %v134
    %v174 = vld [vmem:[#allocation2] sm:$0xf]
    %v175 = vld [vmem:[#allocation2 + $0x4] sm:$0xf]
    %v176 = vld [vmem:[#allocation2 + $0x8] sm:$0xf]
    %v177 = vld [vmem:[#allocation2 + $0xc] sm:$0xf]
    %v178 = vld [vmem:[#allocation2 + $0x10] sm:$0xf]
    %v179 = vld [vmem:[#allocation2 + $0x14] sm:$0xf]
    %v180 = vld [vmem:[#allocation2 + $0x18] sm:$0xf]
    %v181 = vld [vmem:[#allocation2 + $0x1c] sm:$0xf]
    %v182 = vld [vmem:[#allocation2 + $0x20] sm:$0xf]
    %v183 = vld [vmem:[#allocation2 + $0x24] sm:$0xf]
    %v184 = vld [vmem:[#allocation2 + $0x28] sm:$0xf]
    %v185 = vld [vmem:[#allocation2 + $0x2c] sm:$0xf]
    %v186 = vld [vmem:[#allocation2 + $0x30] sm:$0xf]
    %v187 = vld [vmem:[#allocation2 + $0x34] sm:$0xf]
    %v188 = vld [vmem:[#allocation2 + $0x38] sm:$0xf]
    %v189 = vld [vmem:[#allocation2 + $0x3c] sm:$0xf]
    %v190 = vld [vmem:[#allocation2 + $0x40] sm:$0xf]
    %v191 = vld [vmem:[#allocation2 + $0x44] sm:$0xf]
    %v192 = vld [vmem:[#allocation2 + $0x48] sm:$0xf]
    %v193 = vld [vmem:[#allocation2 + $0x4c] sm:$0xf]
    %v194 = vld [vmem:[#allocation2 + $0x50] sm:$0xf]
    %v195 = vld [vmem:[#allocation2 + $0x54] sm:$0xf]
    %v196 = vld [vmem:[#allocation2 + $0x58] sm:$0xf]
    %v197 = vld [vmem:[#allocation2 + $0x5c] sm:$0xf]
    %v198 = vld [vmem:[#allocation2 + $0x60] sm:$0xf]
    %v199 = vld [vmem:[#allocation2 + $0x64] sm:$0xf]
    %v200 = vld [vmem:[#allocation2 + $0x68] sm:$0xf]
    %v201 = vld [vmem:[#allocation2 + $0x6c] sm:$0xf]
    %v202 = vld [vmem:[#allocation2 + $0x70] sm:$0xf]
    %v203 = vld [vmem:[#allocation2 + $0x74] sm:$0xf]
    %v204 = vld [vmem:[#allocation2 + $0x78] sm:$0xf]
    %v205 = vld [vmem:[#allocation2 + $0x7c] sm:$0xf]
    %v206 = vld [vmem:[#allocation2 + $0x80] sm:$0xf]
    %v207 = vld [vmem:[#allocation2 + $0x84] sm:$0xf]
    %v208 = vld [vmem:[#allocation2 + $0x88] sm:$0xf]
    %v209 = vld [vmem:[#allocation2 + $0x8c] sm:$0xf]
    %v210 = vld [vmem:[#allocation2 + $0x90] sm:$0xf]
    %v211 = vld [vmem:[#allocation2 + $0x94] sm:$0xf]
    %v212 = vld [vmem:[#allocation2 + $0x98] sm:$0xf]
    %v213 = vld [vmem:[#allocation2 + $0x9c] sm:$0xf]
    %v214 = vld [vmem:[#allocation2 + $0xa0] sm:$0xf]
    %v215 = vld [vmem:[#allocation2 + $0xa4] sm:$0xf]
    %v216 = vld [vmem:[#allocation2 + $0xa8] sm:$0xf]
    %v217 = vld [vmem:[#allocation2 + $0xac] sm:$0xf]
    %v218 = vld [vmem:[#allocation2 + $0xb0] sm:$0xf]
    %v219 = vld [vmem:[#allocation2 + $0xb4] sm:$0xf]
    %v220 = vld [vmem:[#allocation2 + $0xb8] sm:$0xf]
    %v221 = vld [vmem:[#allocation2 + $0xbc] sm:$0xf]
    %v222 = vld [vmem:[#allocation2 + $0xc0] sm:$0xf]
    %v223 = vld [vmem:[#allocation2 + $0xc4] sm:$0xf]
    %v224 = vld [vmem:[#allocation2 + $0xc8] sm:$0xf]
    %v225 = vld [vmem:[#allocation2 + $0xcc] sm:$0xf]
    %v226 = vld [vmem:[#allocation2 + $0xd0] sm:$0xf]
    %v227 = vld [vmem:[#allocation2 + $0xd4] sm:$0xf]
    %v228 = vld [vmem:[#allocation2 + $0xd8] sm:$0xf]
    %v229 = vld [vmem:[#allocation2 + $0xdc] sm:$0xf]
    %v230 = vld [vmem:[#allocation2 + $0xe0] sm:$0xf]
    %v231 = vld [vmem:[#allocation2 + $0xe4] sm:$0xf]
    %v232 = vld [vmem:[#allocation2 + $0xe8] sm:$0xf]
    %v233 = vld [vmem:[#allocation2 + $0xec] sm:$0xf]
    %v234 = vld [vmem:[#allocation2 + $0xf0] sm:$0xf]
    %v235 = vld [vmem:[#allocation2 + $0xf4] sm:$0xf]
    %v236 = vld [vmem:[#allocation2 + $0xf8] sm:$0xf]
    %v237 = vld [vmem:[#allocation2 + $0xfc] sm:$0xf]
    %v238 = vld [vmem:[#allocation2 + $0x100] sm:$0xf]
    %v239 = vld [vmem:[#allocation2 + $0x104] sm:$0xf]
    %v240 = vld [vmem:[#allocation2 + $0x108] sm:$0xf]
    %v241 = vld [vmem:[#allocation2 + $0x10c] sm:$0xf]
    %v242 = vld [vmem:[#allocation2 + $0x110] sm:$0xf]
    %v243 = vld [vmem:[#allocation2 + $0x114] sm:$0xf]
    %v244 = vld [vmem:[#allocation2 + $0x118] sm:$0xf]
    %v245 = vld [vmem:[#allocation2 + $0x11c] sm:$0xf]
    %v246 = vld [vmem:[#allocation2 + $0x120] sm:$0xf]
    %v247 = vld [vmem:[#allocation2 + $0x124] sm:$0xf]
    %v248 = vld [vmem:[#allocation2 + $0x128] sm:$0xf]
    %v249 = vld [vmem:[#allocation2 + $0x12c] sm:$0xf]
    %v250 = vld [vmem:[#allocation2 + $0x130] sm:$0xf]
    %v251 = vld [vmem:[#allocation2 + $0x134] sm:$0xf]
    %v252 = vld [vmem:[#allocation2 + $0x138] sm:$0xf]
    %v253 = vld [vmem:[#allocation2 + $0x13c] sm:$0xf]
    %v254 = vld [vmem:[#allocation2 + $0x140] sm:$0xf]
    %v255 = vld [vmem:[#allocation2 + $0x144] sm:$0xf]
    %v256 = vld [vmem:[#allocation2 + $0x148] sm:$0xf]
    %v257 = vld [vmem:[#allocation2 + $0x14c] sm:$0xf]
    %v258 = vld [vmem:[#allocation2 + $0x150] sm:$0xf]
    %v259 = vld [vmem:[#allocation2 + $0x154] sm:$0xf]
    %v260 = vld [vmem:[#allocation2 + $0x158] sm:$0xf]
    %v261 = vld [vmem:[#allocation2 + $0x15c] sm:$0xf]
    %v262 = vld [vmem:[#allocation2 + $0x160] sm:$0xf]
    %v263 = vld [vmem:[#allocation2 + $0x164] sm:$0xf]
    %v264 = vld [vmem:[#allocation2 + $0x168] sm:$0xf]
    %v265 = vld [vmem:[#allocation2 + $0x16c] sm:$0xf]
    %v266 = vld [vmem:[#allocation2 + $0x170] sm:$0xf]
    %v267 = vld [vmem:[#allocation2 + $0x174] sm:$0xf]
    %v268 = vld [vmem:[#allocation2 + $0x178] sm:$0xf]
    %v269 = vld [vmem:[#allocation2 + $0x17c] sm:$0xf]
    %v270 = vld [vmem:[#allocation2 + $0x180] sm:$0xf]
    %v271 = vld [vmem:[#allocation2 + $0x184] sm:$0xf]
    %v272 = vld [vmem:[#allocation2 + $0x188] sm:$0xf]
    %v273 = vld [vmem:[#allocation2 + $0x18c] sm:$0xf]
    %v274 = vld [vmem:[#allocation2 + $0x190] sm:$0xf]
    %v275 = vld [vmem:[#allocation2 + $0x194] sm:$0xf]
    %v276 = vld [vmem:[#allocation2 + $0x198] sm:$0xf]
    %v277 = vld [vmem:[#allocation2 + $0x19c] sm:$0xf]
    %v278 = vld [vmem:[#allocation2 + $0x1a0] sm:$0xf]
    %v279 = vld [vmem:[#allocation2 + $0x1a4] sm:$0xf]
    %v280 = vld [vmem:[#allocation2 + $0x1a8] sm:$0xf]
    %v281 = vld [vmem:[#allocation2 + $0x1ac] sm:$0xf]
    %v282 = vld [vmem:[#allocation2 + $0x1b0] sm:$0xf]
    %v283 = vld [vmem:[#allocation2 + $0x1b4] sm:$0xf]
    %v284 = vld [vmem:[#allocation2 + $0x1b8] sm:$0xf]
    %v285 = vld [vmem:[#allocation2 + $0x1bc] sm:$0xf]
    %v286 = vld [vmem:[#allocation2 + $0x1c0] sm:$0xf]
    %v287 = vld [vmem:[#allocation2 + $0x1c4] sm:$0xf]
    %v288 = vld [vmem:[#allocation2 + $0x1c8] sm:$0xf]
    %v289 = vld [vmem:[#allocation2 + $0x1cc] sm:$0xf]
    %v290 = vld [vmem:[#allocation2 + $0x1d0] sm:$0xf]
    %v291 = vld [vmem:[#allocation2 + $0x1d4] sm:$0xf]
    %v292 = vld [vmem:[#allocation2 + $0x1d8] sm:$0xf]
    %v293 = vld [vmem:[#allocation2 + $0x1dc] sm:$0xf]
    %v294 = vld [vmem:[#allocation2 + $0x1e0] sm:$0xf]
    %v295 = vld [vmem:[#allocation2 + $0x1e4] sm:$0xf]
    %v296 = vld [vmem:[#allocation2 + $0x1e8] sm:$0xf]
    %v297 = vld [vmem:[#allocation2 + $0x1ec] sm:$0xf]
    %v298 = vld [vmem:[#allocation2 + $0x1f0] sm:$0xf]
    %v299 = vld [vmem:[#allocation2 + $0x1f4] sm:$0xf]
    %v300 = vld [vmem:[#allocation2 + $0x1f8] sm:$0xf]
    %v301 = vld [vmem:[#allocation2 + $0x1fc] sm:$0xf]
    %v302 = vld [vmem:[#allocation2 + $0x200] sm:$0xf]
    %v303 = vld [vmem:[#allocation2 + $0x204] sm:$0xf]
    %v304 = vld [vmem:[#allocation2 + $0x208] sm:$0xf]
    %v305 = vld [vmem:[#allocation2 + $0x20c] sm:$0xf]
    %v306 = vld [vmem:[#allocation2 + $0x210] sm:$0xf]
    %v307 = vld [vmem:[#allocation2 + $0x214] sm:$0xf]
    %v308 = vld [vmem:[#allocation2 + $0x218] sm:$0xf]
    %v309 = vld [vmem:[#allocation2 + $0x21c] sm:$0xf]
    %v310 = vld [vmem:[#allocation2 + $0x220] sm:$0xf]
    %v311 = vld [vmem:[#allocation2 + $0x224] sm:$0xf]
    %v312 = vld [vmem:[#allocation2 + $0x228] sm:$0xf]
    %v313 = vld [vmem:[#allocation2 + $0x22c] sm:$0xf]
    %v314 = vld [vmem:[#allocation2 + $0x230] sm:$0xf]
    %v315 = vld [vmem:[#allocation2 + $0x234] sm:$0xf]
    %v316 = vld [vmem:[#allocation2 + $0x238] sm:$0xf]
    %v317 = vld [vmem:[#allocation2 + $0x23c] sm:$0xf]
    %v318 = vld [vmem:[#allocation2 + $0x240] sm:$0xf]
    %v319 = vld [vmem:[#allocation2 + $0x244] sm:$0xf]
    %v320 = vld [vmem:[#allocation2 + $0x248] sm:$0xf]
    %v321 = vld [vmem:[#allocation2 + $0x24c] sm:$0xf]
    %v322 = vld [vmem:[#allocation2 + $0x250] sm:$0xf]
    %v323 = vld [vmem:[#allocation2 + $0x254] sm:$0xf]
    %v324 = vld [vmem:[#allocation2 + $0x258] sm:$0xf]
    %v325 = vld [vmem:[#allocation2 + $0x25c] sm:$0xf]
    %v326 = vld [vmem:[#allocation2 + $0x260] sm:$0xf]
    %v327 = vld [vmem:[#allocation2 + $0x264] sm:$0xf]
    %v328 = vld [vmem:[#allocation2 + $0x268] sm:$0xf]
    %v329 = vld [vmem:[#allocation2 + $0x26c] sm:$0xf]
    %v330 = vld [vmem:[#allocation2 + $0x270] sm:$0xf]
    %v331 = vld [vmem:[#allocation2 + $0x274] sm:$0xf]
    %v332 = vld [vmem:[#allocation2 + $0x278] sm:$0xf]
    %v333 = vld [vmem:[#allocation2 + $0x27c] sm:$0xf]
    %v334 = vld [vmem:[#allocation2 + $0x280] sm:$0xf]
    %v335 = vld [vmem:[#allocation2 + $0x284] sm:$0xf]
    %v336 = vld [vmem:[#allocation2 + $0x288] sm:$0xf]
    %v337 = vld [vmem:[#allocation2 + $0x28c] sm:$0xf]
    %v338 = vld [vmem:[#allocation2 + $0x290] sm:$0xf]
    %v339 = vld [vmem:[#allocation2 + $0x294] sm:$0xf]
    %v340 = vld [vmem:[#allocation2 + $0x298] sm:$0xf]
    %v341 = vld [vmem:[#allocation2 + $0x29c] sm:$0xf]
    %v342 = vld [vmem:[#allocation2 + $0x2a0] sm:$0xf]
    %v343 = vld [vmem:[#allocation2 + $0x2a4] sm:$0xf]
    %v344 = vld [vmem:[#allocation2 + $0x2a8] sm:$0xf]
    %v345 = vld [vmem:[#allocation2 + $0x2ac] sm:$0xf]
    %v346 = vld [vmem:[#allocation2 + $0x2b0] sm:$0xf]
    %v347 = vld [vmem:[#allocation2 + $0x2b4] sm:$0xf]
    %v348 = vld [vmem:[#allocation2 + $0x2b8] sm:$0xf]
    %v349 = vld [vmem:[#allocation2 + $0x2bc] sm:$0xf]
    %v350 = vld [vmem:[#allocation2 + $0x2c0] sm:$0xf]
    %v351 = vld [vmem:[#allocation2 + $0x2c4] sm:$0xf]
    %v352 = vld [vmem:[#allocation2 + $0x2c8] sm:$0xf]
    %v353 = vld [vmem:[#allocation2 + $0x2cc] sm:$0xf]
    %v354 = vld [vmem:[#allocation2 + $0x2d0] sm:$0xf]
    %v355 = vld [vmem:[#allocation2 + $0x2d4] sm:$0xf]
    %v356 = vld [vmem:[#allocation2 + $0x2d8] sm:$0xf]
    %v357 = vld [vmem:[#allocation2 + $0x2dc] sm:$0xf]
    %v358 = vld [vmem:[#allocation2 + $0x2e0] sm:$0xf]
    %v359 = vld [vmem:[#allocation2 + $0x2e4] sm:$0xf]
    %v360 = vld [vmem:[#allocation2 + $0x2e8] sm:$0xf]
    %v361 = vld [vmem:[#allocation2 + $0x2ec] sm:$0xf]
    %v362 = vld [vmem:[#allocation2 + $0x2f0] sm:$0xf]
    %v363 = vld [vmem:[#allocation2 + $0x2f4] sm:$0xf]
    %v364 = vld [vmem:[#allocation2 + $0x2f8] sm:$0xf]
    %v365 = vld [vmem:[#allocation2 + $0x2fc] sm:$0xf]
    %v366 = vld [vmem:[#allocation2 + $0x300] sm:$0xf]
    %v367 = vld [vmem:[#allocation2 + $0x304] sm:$0xf]
    %v368 = vld [vmem:[#allocation2 + $0x308] sm:$0xf]
    %v369 = vld [vmem:[#allocation2 + $0x30c] sm:$0xf]
    %v370 = vld [vmem:[#allocation2 + $0x310] sm:$0xf]
    %v371 = vld [vmem:[#allocation2 + $0x314] sm:$0xf]
    %v372 = vld [vmem:[#allocation2 + $0x318] sm:$0xf]
    %v373 = vld [vmem:[#allocation2 + $0x31c] sm:$0xf]
    %v374 = vld [vmem:[#allocation2 + $0x320] sm:$0xf]
    %v375 = vld [vmem:[#allocation2 + $0x324] sm:$0xf]
    %v376 = vld [vmem:[#allocation2 + $0x328] sm:$0xf]
    %v377 = vld [vmem:[#allocation2 + $0x32c] sm:$0xf]
    %v378 = vld [vmem:[#allocation2 + $0x330] sm:$0xf]
    %v379 = vld [vmem:[#allocation2 + $0x334] sm:$0xf]
    %v380 = vld [vmem:[#allocation2 + $0x338] sm:$0xf]
    %v381 = vld [vmem:[#allocation2 + $0x33c] sm:$0xf]
    %v382 = vld [vmem:[#allocation2 + $0x340] sm:$0xf]
    %v383 = vld [vmem:[#allocation2 + $0x344] sm:$0xf]
    %v384 = vld [vmem:[#allocation2 + $0x348] sm:$0xf]
    %v385 = vld [vmem:[#allocation2 + $0x34c] sm:$0xf]
    %v386 = vld [vmem:[#allocation2 + $0x350] sm:$0xf]
    %v387 = vld [vmem:[#allocation2 + $0x354] sm:$0xf]
    %v388 = vld [vmem:[#allocation2 + $0x358] sm:$0xf]
    %v389 = vld [vmem:[#allocation2 + $0x35c] sm:$0xf]
    %v390 = vld [vmem:[#allocation2 + $0x360] sm:$0xf]
    %v391 = vld [vmem:[#allocation2 + $0x364] sm:$0xf]
    %v392 = vld [vmem:[#allocation2 + $0x368] sm:$0xf]
    %v393 = vld [vmem:[#allocation2 + $0x36c] sm:$0xf]
    %v394 = vld [vmem:[#allocation2 + $0x370] sm:$0xf]
    %v395 = vld [vmem:[#allocation2 + $0x374] sm:$0xf]
    %v396 = vld [vmem:[#allocation2 + $0x378] sm:$0xf]
    %v397 = vld [vmem:[#allocation2 + $0x37c] sm:$0xf]
    %v398 = vld [vmem:[#allocation2 + $0x380] sm:$0xf]
    %v399 = vld [vmem:[#allocation2 + $0x384] sm:$0xf]
    %v400 = vld [vmem:[#allocation2 + $0x388] sm:$0xf]
    %v401 = vld [vmem:[#allocation2 + $0x38c] sm:$0xf]
    %v402 = vld [vmem:[#allocation2 + $0x390] sm:$0xf]
    %v403 = vld [vmem:[#allocation2 + $0x394] sm:$0xf]
    %v404 = vld [vmem:[#allocation2 + $0x398] sm:$0xf]
    %v405 = vld [vmem:[#allocation2 + $0x39c] sm:$0xf]
    %v406 = vld [vmem:[#allocation2 + $0x3a0] sm:$0xf]
    %v407 = vld [vmem:[#allocation2 + $0x3a4] sm:$0xf]
    %v408 = vld [vmem:[#allocation2 + $0x3a8] sm:$0xf]
    %v409 = vld [vmem:[#allocation2 + $0x3ac] sm:$0xf]
    %v410 = vld [vmem:[#allocation2 + $0x3b0] sm:$0xf]
    %v411 = vld [vmem:[#allocation2 + $0x3b4] sm:$0xf]
    %v412 = vld [vmem:[#allocation2 + $0x3b8] sm:$0xf]
    %v413 = vld [vmem:[#allocation2 + $0x3bc] sm:$0xf]
    %v414 = vld [vmem:[#allocation2 + $0x3c0] sm:$0xf]
    %v415 = vld [vmem:[#allocation2 + $0x3c4] sm:$0xf]
    %v416 = vld [vmem:[#allocation2 + $0x3c8] sm:$0xf]
    %v417 = vld [vmem:[#allocation2 + $0x3cc] sm:$0xf]
    %v418 = vld [vmem:[#allocation2 + $0x3d0] sm:$0xf]
    %v419 = vld [vmem:[#allocation2 + $0x3d4] sm:$0xf]
    %v420 = vld [vmem:[#allocation2 + $0x3d8] sm:$0xf]
    %v421 = vld [vmem:[#allocation2 + $0x3dc] sm:$0xf]
    %v422 = vld [vmem:[#allocation2 + $0x3e0] sm:$0xf]
    %v423 = vld [vmem:[#allocation2 + $0x3e4] sm:$0xf]
    %v424 = vld [vmem:[#allocation2 + $0x3e8] sm:$0xf]
    %v425 = vld [vmem:[#allocation2 + $0x3ec] sm:$0xf]
    %v426 = vld [vmem:[#allocation2 + $0x3f0] sm:$0xf]
    %v427 = vld [vmem:[#allocation2 + $0x3f4] sm:$0xf]
    %v428 = vld [vmem:[#allocation2 + $0x3f8] sm:$0xf]
    %v429 = vld [vmem:[#allocation2 + $0x3fc] sm:$0xf]
    %v430 = vld [vmem:[#allocation2 + $0x400] sm:$0xf]
    %v431 = vld [vmem:[#allocation2 + $0x404] sm:$0xf]
    %v432 = vld [vmem:[#allocation2 + $0x408] sm:$0xf]
    %v433 = vld [vmem:[#allocation2 + $0x40c] sm:$0xf]
    %v434 = vld [vmem:[#allocation2 + $0x410] sm:$0xf]
    %v435 = vld [vmem:[#allocation2 + $0x414] sm:$0xf]
    %v436 = vld [vmem:[#allocation2 + $0x418] sm:$0xf]
    %v437 = vld [vmem:[#allocation2 + $0x41c] sm:$0xf]
    %v438 = vld [vmem:[#allocation2 + $0x420] sm:$0xf]
    %v439 = vld [vmem:[#allocation2 + $0x424] sm:$0xf]
    %v440 = vld [vmem:[#allocation2 + $0x428] sm:$0xf]
    %v441 = vld [vmem:[#allocation2 + $0x42c] sm:$0xf]
    %v442 = vld [vmem:[#allocation2 + $0x430] sm:$0xf]
    %v443 = vld [vmem:[#allocation2 + $0x434] sm:$0xf]
    %v444 = vld [vmem:[#allocation2 + $0x438] sm:$0xf]
    %v445 = vld [vmem:[#allocation2 + $0x43c] sm:$0xf]
    %v446 = vld [vmem:[#allocation2 + $0x440] sm:$0xf]
    %v447 = vld [vmem:[#allocation2 + $0x444] sm:$0xf]
    %v448 = vld [vmem:[#allocation2 + $0x448] sm:$0xf]
    %v449 = vld [vmem:[#allocation2 + $0x44c] sm:$0xf]
    %v450 = vld [vmem:[#allocation2 + $0x450] sm:$0xf]
    %v451 = vld [vmem:[#allocation2 + $0x454] sm:$0xf]
    %v452 = vld [vmem:[#allocation2 + $0x458] sm:$0xf]
    %v453 = vld [vmem:[#allocation2 + $0x45c] sm:$0xf]
    %v454 = vld [vmem:[#allocation2 + $0x460] sm:$0xf]
    %v455 = vld [vmem:[#allocation2 + $0x464] sm:$0xf]
    %v456 = vld [vmem:[#allocation2 + $0x468] sm:$0xf]
    %v457 = vld [vmem:[#allocation2 + $0x46c] sm:$0xf]
    %v458 = vld [vmem:[#allocation2 + $0x470] sm:$0xf]
    %v459 = vld [vmem:[#allocation2 + $0x474] sm:$0xf]
    %v460 = vld [vmem:[#allocation2 + $0x478] sm:$0xf]
    %v461 = vld [vmem:[#allocation2 + $0x47c] sm:$0xf]
    %v462 = vld [vmem:[#allocation2 + $0x480] sm:$0xf]
    %v463 = vld [vmem:[#allocation2 + $0x484] sm:$0xf]
    %v464 = vld [vmem:[#allocation2 + $0x488] sm:$0xf]
    %v465 = vld [vmem:[#allocation2 + $0x48c] sm:$0xf]
    %v466 = vld [vmem:[#allocation2 + $0x490] sm:$0xf]
    %v467 = vld [vmem:[#allocation2 + $0x494] sm:$0xf]
    %v468 = vld [vmem:[%s2] sm:$0x1]
    %v470 = vlaneseq
    %v471 = vshrl.u32 %v470, 7
    %v472 = vsub.s32 0, %v471
    %v473 = vrot.slane %v468, %v472
    %v769 = vunpack.c.l.b16 %v174
    %v770 = vunpack.c.l.b16 %v175
    %v771 = vunpack.c.l.b16 %v176
    %v772 = vunpack.c.l.b16 %v177
    %v773 = vunpack.c.l.b16 %v178
    %v774 = vunpack.c.l.b16 %v179
    %v775 = vunpack.c.l.b16 %v180
    %v776 = vunpack.c.l.b16 %v181
    %v777 = vunpack.c.l.b16 %v182
    %v778 = vunpack.c.l.b16 %v183
    %v779 = vunpack.c.l.b16 %v184
    %v780 = vunpack.c.l.b16 %v185
    %v781 = vunpack.c.l.b16 %v186
    %v782 = vunpack.c.l.b16 %v187
    %v783 = vunpack.c.l.b16 %v188
    %v784 = vunpack.c.l.b16 %v189
    %v785 = vunpack.c.l.b16 %v190
    %v786 = vunpack.c.l.b16 %v191
    %v787 = vunpack.c.l.b16 %v192
    %v788 = vunpack.c.l.b16 %v193
    %v789 = vunpack.c.l.b16 %v194
    %v790 = vunpack.c.l.b16 %v195
    %v791 = vunpack.c.l.b16 %v196
    %v792 = vunpack.c.l.b16 %v197
    %v793 = vunpack.c.l.b16 %v198
    %v794 = vunpack.c.l.b16 %v199
    %v795 = vunpack.c.l.b16 %v200
    %v796 = vunpack.c.l.b16 %v201
    %v797 = vunpack.c.l.b16 %v202
    %v798 = vunpack.c.l.b16 %v203
    %v799 = vunpack.c.l.b16 %v204
    %v800 = vunpack.c.l.b16 %v205
    %v801 = vunpack.c.l.b16 %v206
    %v802 = vunpack.c.l.b16 %v207
    %v803 = vunpack.c.l.b16 %v208
    %v804 = vunpack.c.l.b16 %v209
    %v805 = vunpack.c.l.b16 %v210
    %v806 = vunpack.c.l.b16 %v211
    %v807 = vunpack.c.l.b16 %v212
    %v808 = vunpack.c.l.b16 %v213
    %v809 = vunpack.c.l.b16 %v214
    %v810 = vunpack.c.l.b16 %v215
    %v811 = vunpack.c.l.b16 %v216
    %v812 = vunpack.c.l.b16 %v217
    %v813 = vunpack.c.l.b16 %v218
    %v814 = vunpack.c.l.b16 %v219
    %v815 = vunpack.c.l.b16 %v220
    %v816 = vunpack.c.l.b16 %v221
    %v817 = vunpack.c.l.b16 %v222
    %v818 = vunpack.c.l.b16 %v223
    %v819 = vunpack.c.l.b16 %v224
    %v820 = vunpack.c.l.b16 %v225
    %v821 = vunpack.c.l.b16 %v226
    %v822 = vunpack.c.l.b16 %v227
    %v823 = vunpack.c.l.b16 %v228
    %v824 = vunpack.c.l.b16 %v229
    %v825 = vunpack.c.l.b16 %v230
    %v826 = vunpack.c.l.b16 %v231
    %v827 = vunpack.c.l.b16 %v232
    %v828 = vunpack.c.l.b16 %v233
    %v829 = vunpack.c.l.b16 %v234
    %v830 = vunpack.c.l.b16 %v235
    %v831 = vunpack.c.l.b16 %v236
    %v832 = vunpack.c.l.b16 %v237
    %v833 = vunpack.c.l.b16 %v238
    %v834 = vunpack.c.l.b16 %v239
    %v835 = vunpack.c.l.b16 %v240
    %v836 = vunpack.c.l.b16 %v241
    %v837 = vunpack.c.l.b16 %v242
    %v838 = vunpack.c.l.b16 %v243
    %v839 = vunpack.c.l.b16 %v244
    %v840 = vunpack.c.l.b16 %v245
    %v841 = vunpack.c.l.b16 %v246
    %v842 = vunpack.c.l.b16 %v247
    %v843 = vunpack.c.l.b16 %v248
    %v844 = vunpack.c.l.b16 %v249
    %v845 = vunpack.c.l.b16 %v250
    %v846 = vunpack.c.l.b16 %v251
    %v847 = vunpack.c.l.b16 %v252
    %v848 = vunpack.c.l.b16 %v253
    %v849 = vunpack.c.l.b16 %v254
    %v850 = vunpack.c.l.b16 %v255
    %v851 = vunpack.c.l.b16 %v256
    %v852 = vunpack.c.l.b16 %v257
    %v853 = vunpack.c.l.b16 %v258
    %v854 = vunpack.c.l.b16 %v259
    %v855 = vunpack.c.l.b16 %v260
    %v856 = vunpack.c.l.b16 %v261
    %v857 = vunpack.c.l.b16 %v262
    %v858 = vunpack.c.l.b16 %v263
    %v859 = vunpack.c.l.b16 %v264
    %v860 = vunpack.c.l.b16 %v265
    %v861 = vunpack.c.l.b16 %v266
    %v862 = vunpack.c.l.b16 %v267
    %v863 = vunpack.c.l.b16 %v268
    %v864 = vunpack.c.l.b16 %v269
    %v865 = vunpack.c.l.b16 %v270
    %v866 = vunpack.c.l.b16 %v271
    %v867 = vunpack.c.l.b16 %v272
    %v868 = vunpack.c.l.b16 %v273
    %v869 = vunpack.c.l.b16 %v274
    %v870 = vunpack.c.l.b16 %v275
    %v871 = vunpack.c.l.b16 %v276
    %v872 = vunpack.c.l.b16 %v277
    %v873 = vunpack.c.l.b16 %v278
    %v874 = vunpack.c.l.b16 %v279
    %v875 = vunpack.c.l.b16 %v280
    %v876 = vunpack.c.l.b16 %v281
    %v877 = vunpack.c.l.b16 %v282
    %v878 = vunpack.c.l.b16 %v283
    %v879 = vunpack.c.l.b16 %v284
    %v880 = vunpack.c.l.b16 %v285
    %v881 = vunpack.c.l.b16 %v286
    %v882 = vunpack.c.l.b16 %v287
    %v883 = vunpack.c.l.b16 %v288
    %v884 = vunpack.c.l.b16 %v289
    %v885 = vunpack.c.l.b16 %v290
    %v886 = vunpack.c.l.b16 %v291
    %v887 = vunpack.c.l.b16 %v292
    %v888 = vunpack.c.l.b16 %v293
    %v889 = vunpack.c.l.b16 %v294
    %v890 = vunpack.c.l.b16 %v295
    %v891 = vunpack.c.l.b16 %v296
    %v892 = vunpack.c.l.b16 %v297
    %v893 = vunpack.c.l.b16 %v298
    %v894 = vunpack.c.l.b16 %v299
    %v895 = vunpack.c.l.b16 %v300
    %v896 = vunpack.c.l.b16 %v301
    %v897 = vunpack.c.l.b16 %v302
    %v898 = vunpack.c.l.b16 %v303
    %v899 = vunpack.c.l.b16 %v304
    %v900 = vunpack.c.l.b16 %v305
    %v901 = vunpack.c.l.b16 %v306
    %v902 = vunpack.c.l.b16 %v307
    %v903 = vunpack.c.l.b16 %v308
    %v904 = vunpack.c.l.b16 %v309
    %v905 = vunpack.c.l.b16 %v310
    %v906 = vunpack.c.l.b16 %v311
    %v907 = vunpack.c.l.b16 %v312
    %v908 = vunpack.c.l.b16 %v313
    %v909 = vunpack.c.l.b16 %v314
    %v910 = vunpack.c.l.b16 %v315
    %v911 = vunpack.c.l.b16 %v316
    %v912 = vunpack.c.l.b16 %v317
    %v913 = vunpack.c.l.b16 %v318
    %v914 = vunpack.c.l.b16 %v319
    %v915 = vunpack.c.l.b16 %v320
    %v916 = vunpack.c.l.b16 %v321
    %v917 = vunpack.c.l.b16 %v322
    %v918 = vunpack.c.l.b16 %v323
    %v919 = vunpack.c.l.b16 %v324
    %v920 = vunpack.c.l.b16 %v325
    %v921 = vunpack.c.l.b16 %v326
    %v922 = vunpack.c.l.b16 %v327
    %v923 = vunpack.c.l.b16 %v328
    %v924 = vunpack.c.l.b16 %v329
    %v925 = vunpack.c.l.b16 %v330
    %v926 = vunpack.c.l.b16 %v331
    %v927 = vunpack.c.l.b16 %v332
    %v928 = vunpack.c.l.b16 %v333
    %v929 = vunpack.c.l.b16 %v334
    %v930 = vunpack.c.l.b16 %v335
    %v931 = vunpack.c.l.b16 %v336
    %v932 = vunpack.c.l.b16 %v337
    %v933 = vunpack.c.l.b16 %v338
    %v934 = vunpack.c.l.b16 %v339
    %v935 = vunpack.c.l.b16 %v340
    %v936 = vunpack.c.l.b16 %v341
    %v937 = vunpack.c.l.b16 %v342
    %v938 = vunpack.c.l.b16 %v343
    %v939 = vunpack.c.l.b16 %v344
    %v940 = vunpack.c.l.b16 %v345
    %v941 = vunpack.c.l.b16 %v346
    %v942 = vunpack.c.l.b16 %v347
    %v943 = vunpack.c.l.b16 %v348
    %v944 = vunpack.c.l.b16 %v349
    %v945 = vunpack.c.l.b16 %v350
    %v946 = vunpack.c.l.b16 %v351
    %v947 = vunpack.c.l.b16 %v352
    %v948 = vunpack.c.l.b16 %v353
    %v949 = vunpack.c.l.b16 %v354
    %v950 = vunpack.c.l.b16 %v355
    %v951 = vunpack.c.l.b16 %v356
    %v952 = vunpack.c.l.b16 %v357
    %v953 = vunpack.c.l.b16 %v358
    %v954 = vunpack.c.l.b16 %v359
    %v955 = vunpack.c.l.b16 %v360
    %v956 = vunpack.c.l.b16 %v361
    %v957 = vunpack.c.l.b16 %v362
    %v958 = vunpack.c.l.b16 %v363
    %v959 = vunpack.c.l.b16 %v364
    %v960 = vunpack.c.l.b16 %v365
    %v961 = vunpack.c.l.b16 %v366
    %v962 = vunpack.c.l.b16 %v367
    %v963 = vunpack.c.l.b16 %v368
    %v964 = vunpack.c.l.b16 %v369
    %v965 = vunpack.c.l.b16 %v370
    %v966 = vunpack.c.l.b16 %v371
    %v967 = vunpack.c.l.b16 %v372
    %v968 = vunpack.c.l.b16 %v373
    %v969 = vunpack.c.l.b16 %v374
    %v970 = vunpack.c.l.b16 %v375
    %v971 = vunpack.c.l.b16 %v376
    %v972 = vunpack.c.l.b16 %v377
    %v973 = vunpack.c.l.b16 %v378
    %v974 = vunpack.c.l.b16 %v379
    %v975 = vunpack.c.l.b16 %v380
    %v976 = vunpack.c.l.b16 %v381
    %v977 = vunpack.c.l.b16 %v382
    %v978 = vunpack.c.l.b16 %v383
    %v979 = vunpack.c.l.b16 %v384
    %v980 = vunpack.c.l.b16 %v385
    %v981 = vunpack.c.l.b16 %v386
    %v982 = vunpack.c.l.b16 %v387
    %v983 = vunpack.c.l.b16 %v388
    %v984 = vunpack.c.l.b16 %v389
    %v985 = vunpack.c.l.b16 %v390
    %v986 = vunpack.c.l.b16 %v391
    %v987 = vunpack.c.l.b16 %v392
    %v988 = vunpack.c.l.b16 %v393
    %v989 = vunpack.c.l.b16 %v394
    %v990 = vunpack.c.l.b16 %v395
    %v991 = vunpack.c.l.b16 %v396
    %v992 = vunpack.c.l.b16 %v397
    %v993 = vunpack.c.l.b16 %v398
    %v994 = vunpack.c.l.b16 %v399
    %v995 = vunpack.c.l.b16 %v400
    %v996 = vunpack.c.l.b16 %v401
    %v997 = vunpack.c.l.b16 %v402
    %v998 = vunpack.c.l.b16 %v403
    %v999 = vunpack.c.l.b16 %v404
    %v1000 = vunpack.c.l.b16 %v405
    %v1001 = vunpack.c.l.b16 %v406
    %v1002 = vunpack.c.l.b16 %v407
    %v1003 = vunpack.c.l.b16 %v408
    %v1004 = vunpack.c.l.b16 %v409
    %v1005 = vunpack.c.l.b16 %v410
    %v1006 = vunpack.c.l.b16 %v411
    %v1007 = vunpack.c.l.b16 %v412
    %v1008 = vunpack.c.l.b16 %v413
    %v1009 = vunpack.c.l.b16 %v414
    %v1010 = vunpack.c.l.b16 %v415
    %v1011 = vunpack.c.l.b16 %v416
    %v1012 = vunpack.c.l.b16 %v417
    %v1013 = vunpack.c.l.b16 %v418
    %v1014 = vunpack.c.l.b16 %v419
    %v1015 = vunpack.c.l.b16 %v420
    %v1016 = vunpack.c.l.b16 %v421
    %v1017 = vunpack.c.l.b16 %v422
    %v1018 = vunpack.c.l.b16 %v423
    %v1019 = vunpack.c.l.b16 %v424
    %v1020 = vunpack.c.l.b16 %v425
    %v1021 = vunpack.c.l.b16 %v426
    %v1022 = vunpack.c.l.b16 %v427
    %v1023 = vunpack.c.l.b16 %v428
    %v1024 = vunpack.c.l.b16 %v429
    %v1025 = vunpack.c.l.b16 %v430
    %v1026 = vunpack.c.l.b16 %v431
    %v1027 = vunpack.c.l.b16 %v432
    %v1028 = vunpack.c.l.b16 %v433
    %v1029 = vunpack.c.l.b16 %v434
    %v1030 = vunpack.c.l.b16 %v435
    %v1031 = vunpack.c.l.b16 %v436
    %v1032 = vunpack.c.l.b16 %v437
    %v1033 = vunpack.c.l.b16 %v438
    %v1034 = vunpack.c.l.b16 %v439
    %v1035 = vunpack.c.l.b16 %v440
    %v1036 = vunpack.c.l.b16 %v441
    %v1037 = vunpack.c.l.b16 %v442
    %v1038 = vunpack.c.l.b16 %v443
    %v1039 = vunpack.c.l.b16 %v444
    %v1040 = vunpack.c.l.b16 %v445
    %v1041 = vunpack.c.l.b16 %v446
    %v1042 = vunpack.c.l.b16 %v447
    %v1043 = vunpack.c.l.b16 %v448
    %v1044 = vunpack.c.l.b16 %v449
    %v1045 = vunpack.c.l.b16 %v450
    %v1046 = vunpack.c.l.b16 %v451
    %v1047 = vunpack.c.l.b16 %v452
    %v1048 = vunpack.c.l.b16 %v453
    %v1049 = vunpack.c.l.b16 %v454
    %v1050 = vunpack.c.l.b16 %v455
    %v1051 = vunpack.c.l.b16 %v456
    %v1052 = vunpack.c.l.b16 %v457
    %v1053 = vunpack.c.l.b16 %v458
    %v1054 = vunpack.c.l.b16 %v459
    %v1055 = vunpack.c.l.b16 %v460
    %v1056 = vunpack.c.l.b16 %v461
    %v1057 = vunpack.c.l.b16 %v462
    %v1058 = vunpack.c.l.b16 %v463
    %v1059 = vunpack.c.l.b16 %v464
    %v1060 = vunpack.c.l.b16 %v465
    %v1061 = vunpack.c.l.b16 %v466
    %v1062 = vunpack.c.l.b16 %v467
    %v1063 = vpack.c.b16 %v770, %v769
    %v1064 = vpack.c.b16 %v772, %v771
    %v1065 = vpack.c.b16 %v774, %v773
    %v1066 = vpack.c.b16 %v776, %v775
    %v1067 = vpack.c.b16 %v778, %v777
    %v1068 = vpack.c.b16 %v780, %v779
    %v1069 = vpack.c.b16 %v782, %v781
    %v1070 = vpack.c.b16 %v784, %v783
    %v1071 = vpack.c.b16 %v786, %v785
    %v1072 = vpack.c.b16 %v788, %v787
    %v1073 = vpack.c.b16 %v790, %v789
    %v1074 = vpack.c.b16 %v792, %v791
    %v1075 = vpack.c.b16 %v794, %v793
    %v1076 = vpack.c.b16 %v796, %v795
    %v1077 = vpack.c.b16 %v798, %v797
    %v1078 = vpack.c.b16 %v800, %v799
    %v1079 = vpack.c.b16 %v802, %v801
    %v1080 = vpack.c.b16 %v804, %v803
    %v1081 = vpack.c.b16 %v806, %v805
    %v1082 = vpack.c.b16 %v808, %v807
    %v1083 = vpack.c.b16 %v810, %v809
    %v1084 = vpack.c.b16 %v812, %v811
    %v1085 = vpack.c.b16 %v814, %v813
    %v1086 = vpack.c.b16 %v816, %v815
    %v1087 = vpack.c.b16 %v818, %v817
    %v1088 = vpack.c.b16 %v820, %v819
    %v1089 = vpack.c.b16 %v822, %v821
    %v1090 = vpack.c.b16 %v824, %v823
    %v1091 = vpack.c.b16 %v826, %v825
    %v1092 = vpack.c.b16 %v828, %v827
    %v1093 = vpack.c.b16 %v830, %v829
    %v1094 = vpack.c.b16 %v832, %v831
    %v1095 = vpack.c.b16 %v834, %v833
    %v1096 = vpack.c.b16 %v836, %v835
    %v1097 = vpack.c.b16 %v838, %v837
    %v1098 = vpack.c.b16 %v840, %v839
    %v1099 = vpack.c.b16 %v842, %v841
    %v1100 = vpack.c.b16 %v844, %v843
    %v1101 = vpack.c.b16 %v846, %v845
    %v1102 = vpack.c.b16 %v848, %v847
    %v1103 = vpack.c.b16 %v850, %v849
    %v1104 = vpack.c.b16 %v852, %v851
    %v1105 = vpack.c.b16 %v854, %v853
    %v1106 = vpack.c.b16 %v856, %v855
    %v1107 = vpack.c.b16 %v858, %v857
    %v1108 = vpack.c.b16 %v860, %v859
    %v1109 = vpack.c.b16 %v862, %v861
    %v1110 = vpack.c.b16 %v864, %v863
    %v1111 = vpack.c.b16 %v866, %v865
    %v1112 = vpack.c.b16 %v868, %v867
    %v1113 = vpack.c.b16 %v870, %v869
    %v1114 = vpack.c.b16 %v872, %v871
    %v1115 = vpack.c.b16 %v874, %v873
    %v1116 = vpack.c.b16 %v876, %v875
    %v1117 = vpack.c.b16 %v878, %v877
    %v1118 = vpack.c.b16 %v880, %v879
    %v1119 = vpack.c.b16 %v882, %v881
    %v1120 = vpack.c.b16 %v884, %v883
    %v1121 = vpack.c.b16 %v886, %v885
    %v1122 = vpack.c.b16 %v888, %v887
    %v1123 = vpack.c.b16 %v890, %v889
    %v1124 = vpack.c.b16 %v892, %v891
    %v1125 = vpack.c.b16 %v894, %v893
    %v1126 = vpack.c.b16 %v896, %v895
    %v1127 = vpack.c.b16 %v898, %v897
    %v1128 = vpack.c.b16 %v900, %v899
    %v1129 = vpack.c.b16 %v902, %v901
    %v1130 = vpack.c.b16 %v904, %v903
    %v1131 = vpack.c.b16 %v906, %v905
    %v1132 = vpack.c.b16 %v908, %v907
    %v1133 = vpack.c.b16 %v910, %v909
    %v1134 = vpack.c.b16 %v912, %v911
    %v1135 = vpack.c.b16 %v914, %v913
    %v1136 = vpack.c.b16 %v916, %v915
    %v1137 = vpack.c.b16 %v918, %v917
    %v1138 = vpack.c.b16 %v920, %v919
    %v1139 = vpack.c.b16 %v922, %v921
    %v1140 = vpack.c.b16 %v924, %v923
    %v1141 = vpack.c.b16 %v926, %v925
    %v1142 = vpack.c.b16 %v928, %v927
    %v1143 = vpack.c.b16 %v930, %v929
    %v1144 = vpack.c.b16 %v932, %v931
    %v1145 = vpack.c.b16 %v934, %v933
    %v1146 = vpack.c.b16 %v936, %v935
    %v1147 = vpack.c.b16 %v938, %v937
    %v1148 = vpack.c.b16 %v940, %v939
    %v1149 = vpack.c.b16 %v942, %v941
    %v1150 = vpack.c.b16 %v944, %v943
    %v1151 = vpack.c.b16 %v946, %v945
    %v1152 = vpack.c.b16 %v948, %v947
    %v1153 = vpack.c.b16 %v950, %v949
    %v1154 = vpack.c.b16 %v952, %v951
    %v1155 = vpack.c.b16 %v954, %v953
    %v1156 = vpack.c.b16 %v956, %v955
    %v1157 = vpack.c.b16 %v958, %v957
    %v1158 = vpack.c.b16 %v960, %v959
    %v1159 = vpack.c.b16 %v962, %v961
    %v1160 = vpack.c.b16 %v964, %v963
    %v1161 = vpack.c.b16 %v966, %v965
    %v1162 = vpack.c.b16 %v968, %v967
    %v1163 = vpack.c.b16 %v970, %v969
    %v1164 = vpack.c.b16 %v972, %v971
    %v1165 = vpack.c.b16 %v974, %v973
    %v1166 = vpack.c.b16 %v976, %v975
    %v1167 = vpack.c.b16 %v978, %v977
    %v1168 = vpack.c.b16 %v980, %v979
    %v1169 = vpack.c.b16 %v982, %v981
    %v1170 = vpack.c.b16 %v984, %v983
    %v1171 = vpack.c.b16 %v986, %v985
    %v1172 = vpack.c.b16 %v988, %v987
    %v1173 = vpack.c.b16 %v990, %v989
    %v1174 = vpack.c.b16 %v992, %v991
    %v1175 = vpack.c.b16 %v994, %v993
    %v1176 = vpack.c.b16 %v996, %v995
    %v1177 = vpack.c.b16 %v998, %v997
    %v1178 = vpack.c.b16 %v1000, %v999
    %v1179 = vpack.c.b16 %v1002, %v1001
    %v1180 = vpack.c.b16 %v1004, %v1003
    %v1181 = vpack.c.b16 %v1006, %v1005
    %v1182 = vpack.c.b16 %v1008, %v1007
    %v1183 = vpack.c.b16 %v1010, %v1009
    %v1184 = vpack.c.b16 %v1012, %v1011
    %v1185 = vpack.c.b16 %v1014, %v1013
    %v1186 = vpack.c.b16 %v1016, %v1015
    %v1187 = vpack.c.b16 %v1018, %v1017
    %v1188 = vpack.c.b16 %v1020, %v1019
    %v1189 = vpack.c.b16 %v1022, %v1021
    %v1190 = vpack.c.b16 %v1024, %v1023
    %v1191 = vpack.c.b16 %v1026, %v1025
    %v1192 = vpack.c.b16 %v1028, %v1027
    %v1193 = vpack.c.b16 %v1030, %v1029
    %v1194 = vpack.c.b16 %v1032, %v1031
    %v1195 = vpack.c.b16 %v1034, %v1033
    %v1196 = vpack.c.b16 %v1036, %v1035
    %v1197 = vpack.c.b16 %v1038, %v1037
    %v1198 = vpack.c.b16 %v1040, %v1039
    %v1199 = vpack.c.b16 %v1042, %v1041
    %v1200 = vpack.c.b16 %v1044, %v1043
    %v1201 = vpack.c.b16 %v1046, %v1045
    %v1202 = vpack.c.b16 %v1048, %v1047
    %v1203 = vpack.c.b16 %v1050, %v1049
    %v1204 = vpack.c.b16 %v1052, %v1051
    %v1205 = vpack.c.b16 %v1054, %v1053
    %v1206 = vpack.c.b16 %v1056, %v1055
    %v1207 = vpack.c.b16 %v1058, %v1057
    %v1208 = vpack.c.b16 %v1060, %v1059
    %v1209 = vpack.c.b16 %v1062, %v1061
    %vm1357 = vcmask 392192
    %v1359 = vsel %vm1357, %v173, 0
    %1361 = vmatprep.subr.bf16.mxu0 0
    %1362 = vmatpush1.bf16.msra.mxu0 %v1070
    %1363 = vmatprep.subr.bf16.mxu0 0
    %1364 = vmatpush1.bf16.msra.mxu0 %v1069
    %1365 = vmatprep.subr.bf16.mxu0 0
    %1366 = vmatpush1.bf16.msra.mxu0 %v1068
    %1367 = vmatprep.subr.bf16.mxu0 0
    %1368 = vmatpush1.bf16.msra.mxu0 %v1067
    %1369 = vmatprep.subr.bf16.mxu0 0
    %1370 = vmatpush1.bf16.msra.mxu0 %v1066
    %1371 = vmatprep.subr.bf16.mxu0 0
    %1372 = vmatpush1.bf16.msra.mxu0 %v1065
    %1373 = vmatprep.subr.bf16.mxu0 0
    %1374 = vmatpush1.bf16.msra.mxu0 %v1064
    %1375 = vmatprep.subr.bf16.mxu0 0
    %1376 = vmatpush1.bf16.msra.mxu0 %v1063
    %1377 = vmatprep.subr.bf16.mxu0 0
    %1378 = vmatpush2.bf16.msra.mxu0 %v1078
    %1379 = vmatprep.subr.bf16.mxu0 0
    %1380 = vmatpush2.bf16.msra.mxu0 %v1077
    %1381 = vmatprep.subr.bf16.mxu0 0
    %1382 = vmatpush2.bf16.msra.mxu0 %v1076
    %1383 = vmatprep.subr.bf16.mxu0 0
    %1384 = vmatpush2.bf16.msra.mxu0 %v1075
    %1385 = vmatprep.subr.bf16.mxu0 0
    %1386 = vmatpush2.bf16.msra.mxu0 %v1074
    %1387 = vmatprep.subr.bf16.mxu0 0
    %1388 = vmatpush2.bf16.msra.mxu0 %v1073
    %1389 = vmatprep.subr.bf16.mxu0 0
    %1390 = vmatpush2.bf16.msra.mxu0 %v1072
    %1391 = vmatprep.subr.bf16.mxu0 0
    %1392 = vmatpush2.bf16.msra.mxu0 %v1071
    %1393 = vmatprep.mubr.bf16.mxu0 %v156
    %1394 = vmatmul.mubr.bf16.gmra.mxu0 %v155
    %v1395 = vpop.f32.mrf.mxu0
    %v1396 = vadd.f32 %v473, %v1395
    %v1397 = vpop.f32.mrf.mxu0
    %v1398 = vpop.f32.mrf.mxu0
    %v1399 = vpop.f32.mrf.mxu0
    %1400 = vdwg.mxu0
    %1401 = vmatprep.subr.bf16.mxu0 0
    %1402 = vmatpush1.bf16.msra.mxu0 %v1086
    %1403 = vmatprep.subr.bf16.mxu0 0
    %1404 = vmatpush1.bf16.msra.mxu0 %v1085
    %1405 = vmatprep.subr.bf16.mxu0 0
    %1406 = vmatpush1.bf16.msra.mxu0 %v1084
    %1407 = vmatprep.subr.bf16.mxu0 0
    %1408 = vmatpush1.bf16.msra.mxu0 %v1083
    %1409 = vmatprep.subr.bf16.mxu0 0
    %1410 = vmatpush1.bf16.msra.mxu0 %v1082
    %1411 = vmatprep.subr.bf16.mxu0 0
    %1412 = vmatpush1.bf16.msra.mxu0 %v1081
    %1413 = vmatprep.subr.bf16.mxu0 0
    %1414 = vmatpush1.bf16.msra.mxu0 %v1080
    %1415 = vmatprep.subr.bf16.mxu0 0
    %1416 = vmatpush1.bf16.msra.mxu0 %v1079
    %1417 = vmatprep.subr.bf16.mxu0 0
    %1418 = vmatpush2.bf16.msra.mxu0 %v1094
    %1419 = vmatprep.subr.bf16.mxu0 0
    %1420 = vmatpush2.bf16.msra.mxu0 %v1093
    %1421 = vmatprep.subr.bf16.mxu0 0
    %1422 = vmatpush2.bf16.msra.mxu0 %v1092
    %1423 = vmatprep.subr.bf16.mxu0 0
    %1424 = vmatpush2.bf16.msra.mxu0 %v1091
    %1425 = vmatprep.subr.bf16.mxu0 0
    %1426 = vmatpush2.bf16.msra.mxu0 %v1090
    %1427 = vmatprep.subr.bf16.mxu0 0
    %1428 = vmatpush2.bf16.msra.mxu0 %v1089
    %1429 = vmatprep.subr.bf16.mxu0 0
    %1430 = vmatpush2.bf16.msra.mxu0 %v1088
    %1431 = vmatprep.subr.bf16.mxu0 0
    %1432 = vmatpush2.bf16.msra.mxu0 %v1087
    %1433 = vmatprep.mubr.bf16.mxu0 %v158
    %1434 = vmatmul.mubr.bf16.gmra.mxu0 %v157
    %v1435 = vpop.f32.mrf.mxu0
    %v1436 = vadd.f32 %v1396, %v1435
    %v1437 = vpop.f32.mrf.mxu0
    %v1438 = vpop.f32.mrf.mxu0
    %v1439 = vpop.f32.mrf.mxu0
    %1440 = vdwg.mxu0
    %1441 = vmatprep.subr.bf16.mxu0 0
    %1442 = vmatpush1.bf16.msra.mxu0 %v1102
    %1443 = vmatprep.subr.bf16.mxu0 0
    %1444 = vmatpush1.bf16.msra.mxu0 %v1101
    %1445 = vmatprep.subr.bf16.mxu0 0
    %1446 = vmatpush1.bf16.msra.mxu0 %v1100
    %1447 = vmatprep.subr.bf16.mxu0 0
    %1448 = vmatpush1.bf16.msra.mxu0 %v1099
    %1449 = vmatprep.subr.bf16.mxu0 0
    %1450 = vmatpush1.bf16.msra.mxu0 %v1098
    %1451 = vmatprep.subr.bf16.mxu0 0
    %1452 = vmatpush1.bf16.msra.mxu0 %v1097
    %1453 = vmatprep.subr.bf16.mxu0 0
    %1454 = vmatpush1.bf16.msra.mxu0 %v1096
    %1455 = vmatprep.subr.bf16.mxu0 0
    %1456 = vmatpush1.bf16.msra.mxu0 %v1095
    %1457 = vmatprep.subr.bf16.mxu0 0
    %1458 = vmatpush2.bf16.msra.mxu0 %v1110
    %1459 = vmatprep.subr.bf16.mxu0 0
    %1460 = vmatpush2.bf16.msra.mxu0 %v1109
    %1461 = vmatprep.subr.bf16.mxu0 0
    %1462 = vmatpush2.bf16.msra.mxu0 %v1108
    %1463 = vmatprep.subr.bf16.mxu0 0
    %1464 = vmatpush2.bf16.msra.mxu0 %v1107
    %1465 = vmatprep.subr.bf16.mxu0 0
    %1466 = vmatpush2.bf16.msra.mxu0 %v1106
    %1467 = vmatprep.subr.bf16.mxu0 0
    %1468 = vmatpush2.bf16.msra.mxu0 %v1105
    %1469 = vmatprep.subr.bf16.mxu0 0
    %1470 = vmatpush2.bf16.msra.mxu0 %v1104
    %1471 = vmatprep.subr.bf16.mxu0 0
    %1472 = vmatpush2.bf16.msra.mxu0 %v1103
    %1473 = vmatprep.mubr.bf16.mxu0 %v160
    %1474 = vmatmul.mubr.bf16.gmra.mxu0 %v159
    %v1475 = vpop.f32.mrf.mxu0
    %v1476 = vadd.f32 %v1436, %v1475
    %v1477 = vpop.f32.mrf.mxu0
    %v1478 = vpop.f32.mrf.mxu0
    %v1479 = vpop.f32.mrf.mxu0
    %1480 = vdwg.mxu0
    %1481 = vmatprep.subr.bf16.mxu0 0
    %1482 = vmatpush1.bf16.msra.mxu0 %v1118
    %1483 = vmatprep.subr.bf16.mxu0 0
    %1484 = vmatpush1.bf16.msra.mxu0 %v1117
    %1485 = vmatprep.subr.bf16.mxu0 0
    %1486 = vmatpush1.bf16.msra.mxu0 %v1116
    %1487 = vmatprep.subr.bf16.mxu0 0
    %1488 = vmatpush1.bf16.msra.mxu0 %v1115
    %1489 = vmatprep.subr.bf16.mxu0 0
    %1490 = vmatpush1.bf16.msra.mxu0 %v1114
    %1491 = vmatprep.subr.bf16.mxu0 0
    %1492 = vmatpush1.bf16.msra.mxu0 %v1113
    %1493 = vmatprep.subr.bf16.mxu0 0
    %1494 = vmatpush1.bf16.msra.mxu0 %v1112
    %1495 = vmatprep.subr.bf16.mxu0 0
    %1496 = vmatpush1.bf16.msra.mxu0 %v1111
    %1497 = vmatprep.subr.bf16.mxu0 0
    %1498 = vmatpush2.bf16.msra.mxu0 %v1126
    %1499 = vmatprep.subr.bf16.mxu0 0
    %1500 = vmatpush2.bf16.msra.mxu0 %v1125
    %1501 = vmatprep.subr.bf16.mxu0 0
    %1502 = vmatpush2.bf16.msra.mxu0 %v1124
    %1503 = vmatprep.subr.bf16.mxu0 0
    %1504 = vmatpush2.bf16.msra.mxu0 %v1123
    %1505 = vmatprep.subr.bf16.mxu0 0
    %1506 = vmatpush2.bf16.msra.mxu0 %v1122
    %1507 = vmatprep.subr.bf16.mxu0 0
    %1508 = vmatpush2.bf16.msra.mxu0 %v1121
    %1509 = vmatprep.subr.bf16.mxu0 0
    %1510 = vmatpush2.bf16.msra.mxu0 %v1120
    %1511 = vmatprep.subr.bf16.mxu0 0
    %1512 = vmatpush2.bf16.msra.mxu0 %v1119
    %1513 = vmatprep.mubr.bf16.mxu0 %v162
    %1514 = vmatmul.mubr.bf16.gmra.mxu0 %v161
    %v1515 = vpop.f32.mrf.mxu0
    %v1516 = vadd.f32 %v1476, %v1515
    %v1517 = vpop.f32.mrf.mxu0
    %v1518 = vpop.f32.mrf.mxu0
    %v1519 = vpop.f32.mrf.mxu0
    %1520 = vdwg.mxu0
    %1521 = vmatprep.subr.bf16.mxu0 0
    %1522 = vmatpush1.bf16.msra.mxu0 %v1134
    %1523 = vmatprep.subr.bf16.mxu0 0
    %1524 = vmatpush1.bf16.msra.mxu0 %v1133
    %1525 = vmatprep.subr.bf16.mxu0 0
    %1526 = vmatpush1.bf16.msra.mxu0 %v1132
    %1527 = vmatprep.subr.bf16.mxu0 0
    %1528 = vmatpush1.bf16.msra.mxu0 %v1131
    %1529 = vmatprep.subr.bf16.mxu0 0
    %1530 = vmatpush1.bf16.msra.mxu0 %v1130
    %1531 = vmatprep.subr.bf16.mxu0 0
    %1532 = vmatpush1.bf16.msra.mxu0 %v1129
    %1533 = vmatprep.subr.bf16.mxu0 0
    %1534 = vmatpush1.bf16.msra.mxu0 %v1128
    %1535 = vmatprep.subr.bf16.mxu0 0
    %1536 = vmatpush1.bf16.msra.mxu0 %v1127
    %1537 = vmatprep.subr.bf16.mxu0 0
    %1538 = vmatpush2.bf16.msra.mxu0 %v1142
    %1539 = vmatprep.subr.bf16.mxu0 0
    %1540 = vmatpush2.bf16.msra.mxu0 %v1141
    %1541 = vmatprep.subr.bf16.mxu0 0
    %1542 = vmatpush2.bf16.msra.mxu0 %v1140
    %1543 = vmatprep.subr.bf16.mxu0 0
    %1544 = vmatpush2.bf16.msra.mxu0 %v1139
    %1545 = vmatprep.subr.bf16.mxu0 0
    %1546 = vmatpush2.bf16.msra.mxu0 %v1138
    %1547 = vmatprep.subr.bf16.mxu0 0
    %1548 = vmatpush2.bf16.msra.mxu0 %v1137
    %1549 = vmatprep.subr.bf16.mxu0 0
    %1550 = vmatpush2.bf16.msra.mxu0 %v1136
    %1551 = vmatprep.subr.bf16.mxu0 0
    %1552 = vmatpush2.bf16.msra.mxu0 %v1135
    %1553 = vmatprep.mubr.bf16.mxu0 %v164
    %1554 = vmatmul.mubr.bf16.gmra.mxu0 %v163
    %v1555 = vpop.f32.mrf.mxu0
    %v1556 = vadd.f32 %v1516, %v1555
    %v1557 = vpop.f32.mrf.mxu0
    %v1558 = vpop.f32.mrf.mxu0
    %v1559 = vpop.f32.mrf.mxu0
    %1560 = vdwg.mxu0
    %1561 = vmatprep.subr.bf16.mxu0 0
    %1562 = vmatpush1.bf16.msra.mxu0 %v1150
    %1563 = vmatprep.subr.bf16.mxu0 0
    %1564 = vmatpush1.bf16.msra.mxu0 %v1149
    %1565 = vmatprep.subr.bf16.mxu0 0
    %1566 = vmatpush1.bf16.msra.mxu0 %v1148
    %1567 = vmatprep.subr.bf16.mxu0 0
    %1568 = vmatpush1.bf16.msra.mxu0 %v1147
    %1569 = vmatprep.subr.bf16.mxu0 0
    %1570 = vmatpush1.bf16.msra.mxu0 %v1146
    %1571 = vmatprep.subr.bf16.mxu0 0
    %1572 = vmatpush1.bf16.msra.mxu0 %v1145
    %1573 = vmatprep.subr.bf16.mxu0 0
    %1574 = vmatpush1.bf16.msra.mxu0 %v1144
    %1575 = vmatprep.subr.bf16.mxu0 0
    %1576 = vmatpush1.bf16.msra.mxu0 %v1143
    %1577 = vmatprep.subr.bf16.mxu0 0
    %1578 = vmatpush2.bf16.msra.mxu0 %v1158
    %1579 = vmatprep.subr.bf16.mxu0 0
    %1580 = vmatpush2.bf16.msra.mxu0 %v1157
    %1581 = vmatprep.subr.bf16.mxu0 0
    %1582 = vmatpush2.bf16.msra.mxu0 %v1156
    %1583 = vmatprep.subr.bf16.mxu0 0
    %1584 = vmatpush2.bf16.msra.mxu0 %v1155
    %1585 = vmatprep.subr.bf16.mxu0 0
    %1586 = vmatpush2.bf16.msra.mxu0 %v1154
    %1587 = vmatprep.subr.bf16.mxu0 0
    %1588 = vmatpush2.bf16.msra.mxu0 %v1153
    %1589 = vmatprep.subr.bf16.mxu0 0
    %1590 = vmatpush2.bf16.msra.mxu0 %v1152
    %1591 = vmatprep.subr.bf16.mxu0 0
    %1592 = vmatpush2.bf16.msra.mxu0 %v1151
    %1593 = vmatprep.mubr.bf16.mxu0 %v166
    %1594 = vmatmul.mubr.bf16.gmra.mxu0 %v165
    %v1595 = vpop.f32.mrf.mxu0
    %v1596 = vadd.f32 %v1556, %v1595
    %v1597 = vpop.f32.mrf.mxu0
    %v1598 = vpop.f32.mrf.mxu0
    %v1599 = vpop.f32.mrf.mxu0
    %1600 = vdwg.mxu0
    %1601 = vmatprep.subr.bf16.mxu0 0
    %1602 = vmatpush1.bf16.msra.mxu0 %v1166
    %1603 = vmatprep.subr.bf16.mxu0 0
    %1604 = vmatpush1.bf16.msra.mxu0 %v1165
    %1605 = vmatprep.subr.bf16.mxu0 0
    %1606 = vmatpush1.bf16.msra.mxu0 %v1164
    %1607 = vmatprep.subr.bf16.mxu0 0
    %1608 = vmatpush1.bf16.msra.mxu0 %v1163
    %1609 = vmatprep.subr.bf16.mxu0 0
    %1610 = vmatpush1.bf16.msra.mxu0 %v1162
    %1611 = vmatprep.subr.bf16.mxu0 0
    %1612 = vmatpush1.bf16.msra.mxu0 %v1161
    %1613 = vmatprep.subr.bf16.mxu0 0
    %1614 = vmatpush1.bf16.msra.mxu0 %v1160
    %1615 = vmatprep.subr.bf16.mxu0 0
    %1616 = vmatpush1.bf16.msra.mxu0 %v1159
    %1617 = vmatprep.subr.bf16.mxu0 0
    %1618 = vmatpush2.bf16.msra.mxu0 %v1174
    %1619 = vmatprep.subr.bf16.mxu0 0
    %1620 = vmatpush2.bf16.msra.mxu0 %v1173
    %1621 = vmatprep.subr.bf16.mxu0 0
    %1622 = vmatpush2.bf16.msra.mxu0 %v1172
    %1623 = vmatprep.subr.bf16.mxu0 0
    %1624 = vmatpush2.bf16.msra.mxu0 %v1171
    %1625 = vmatprep.subr.bf16.mxu0 0
    %1626 = vmatpush2.bf16.msra.mxu0 %v1170
    %1627 = vmatprep.subr.bf16.mxu0 0
    %1628 = vmatpush2.bf16.msra.mxu0 %v1169
    %1629 = vmatprep.subr.bf16.mxu0 0
    %1630 = vmatpush2.bf16.msra.mxu0 %v1168
    %1631 = vmatprep.subr.bf16.mxu0 0
    %1632 = vmatpush2.bf16.msra.mxu0 %v1167
    %1633 = vmatprep.mubr.bf16.mxu0 %v168
    %1634 = vmatmul.mubr.bf16.gmra.mxu0 %v167
    %v1635 = vpop.f32.mrf.mxu0
    %v1636 = vadd.f32 %v1596, %v1635
    %v1637 = vpop.f32.mrf.mxu0
    %v1638 = vpop.f32.mrf.mxu0
    %v1639 = vpop.f32.mrf.mxu0
    %1640 = vdwg.mxu0
    %1641 = vmatprep.subr.bf16.mxu0 0
    %1642 = vmatpush1.bf16.msra.mxu0 %v1182
    %1643 = vmatprep.subr.bf16.mxu0 0
    %1644 = vmatpush1.bf16.msra.mxu0 %v1181
    %1645 = vmatprep.subr.bf16.mxu0 0
    %1646 = vmatpush1.bf16.msra.mxu0 %v1180
    %1647 = vmatprep.subr.bf16.mxu0 0
    %1648 = vmatpush1.bf16.msra.mxu0 %v1179
    %1649 = vmatprep.subr.bf16.mxu0 0
    %1650 = vmatpush1.bf16.msra.mxu0 %v1178
    %1651 = vmatprep.subr.bf16.mxu0 0
    %1652 = vmatpush1.bf16.msra.mxu0 %v1177
    %1653 = vmatprep.subr.bf16.mxu0 0
    %1654 = vmatpush1.bf16.msra.mxu0 %v1176
    %1655 = vmatprep.subr.bf16.mxu0 0
    %1656 = vmatpush1.bf16.msra.mxu0 %v1175
    %1657 = vmatprep.subr.bf16.mxu0 0
    %1658 = vmatpush2.bf16.msra.mxu0 %v1190
    %1659 = vmatprep.subr.bf16.mxu0 0
    %1660 = vmatpush2.bf16.msra.mxu0 %v1189
    %1661 = vmatprep.subr.bf16.mxu0 0
    %1662 = vmatpush2.bf16.msra.mxu0 %v1188
    %1663 = vmatprep.subr.bf16.mxu0 0
    %1664 = vmatpush2.bf16.msra.mxu0 %v1187
    %1665 = vmatprep.subr.bf16.mxu0 0
    %1666 = vmatpush2.bf16.msra.mxu0 %v1186
    %1667 = vmatprep.subr.bf16.mxu0 0
    %1668 = vmatpush2.bf16.msra.mxu0 %v1185
    %1669 = vmatprep.subr.bf16.mxu0 0
    %1670 = vmatpush2.bf16.msra.mxu0 %v1184
    %1671 = vmatprep.subr.bf16.mxu0 0
    %1672 = vmatpush2.bf16.msra.mxu0 %v1183
    %1673 = vmatprep.mubr.bf16.mxu0 %v170
    %1674 = vmatmul.mubr.bf16.gmra.mxu0 %v169
    %v1675 = vpop.f32.mrf.mxu0
    %v1676 = vadd.f32 %v1636, %v1675
    %v1677 = vpop.f32.mrf.mxu0
    %v1678 = vpop.f32.mrf.mxu0
    %v1679 = vpop.f32.mrf.mxu0
    %1680 = vdwg.mxu0
    %1681 = vmatprep.subr.bf16.mxu0 0
    %1682 = vmatpush1.bf16.msra.mxu0 %v1198
    %1683 = vmatprep.subr.bf16.mxu0 0
    %1684 = vmatpush1.bf16.msra.mxu0 %v1197
    %1685 = vmatprep.subr.bf16.mxu0 0
    %1686 = vmatpush1.bf16.msra.mxu0 %v1196
    %1687 = vmatprep.subr.bf16.mxu0 0
    %1688 = vmatpush1.bf16.msra.mxu0 %v1195
    %1689 = vmatprep.subr.bf16.mxu0 0
    %1690 = vmatpush1.bf16.msra.mxu0 %v1194
    %1691 = vmatprep.subr.bf16.mxu0 0
    %1692 = vmatpush1.bf16.msra.mxu0 %v1193
    %1693 = vmatprep.subr.bf16.mxu0 0
    %1694 = vmatpush1.bf16.msra.mxu0 %v1192
    %1695 = vmatprep.subr.bf16.mxu0 0
    %1696 = vmatpush1.bf16.msra.mxu0 %v1191
    %1697 = vmatprep.subr.bf16.mxu0 0
    %1698 = vmatpush2.bf16.msra.mxu0 %v1206
    %1699 = vmatprep.subr.bf16.mxu0 0
    %1700 = vmatpush2.bf16.msra.mxu0 %v1205
    %1701 = vmatprep.subr.bf16.mxu0 0
    %1702 = vmatpush2.bf16.msra.mxu0 %v1204
    %1703 = vmatprep.subr.bf16.mxu0 0
    %1704 = vmatpush2.bf16.msra.mxu0 %v1203
    %1705 = vmatprep.subr.bf16.mxu0 0
    %1706 = vmatpush2.bf16.msra.mxu0 %v1202
    %1707 = vmatprep.subr.bf16.mxu0 0
    %1708 = vmatpush2.bf16.msra.mxu0 %v1201
    %1709 = vmatprep.subr.bf16.mxu0 0
    %1710 = vmatpush2.bf16.msra.mxu0 %v1200
    %1711 = vmatprep.subr.bf16.mxu0 0
    %1712 = vmatpush2.bf16.msra.mxu0 %v1199
    %1713 = vmatprep.mubr.bf16.mxu0 %v172
    %1714 = vmatmul.mubr.bf16.gmra.mxu0 %v171
    %v1715 = vpop.f32.mrf.mxu0
    %v1716 = vadd.f32 %v1676, %v1715
    %v1717 = vpop.f32.mrf.mxu0
    %v1718 = vpop.f32.mrf.mxu0
    %v1719 = vpop.f32.mrf.mxu0
    %1720 = vdwg.mxu0
    %1721 = vmatprep.subr.bf16.mxu0 0
    %1722 = vmatpush1.bf16.msra.mxu0 0
    %1723 = vmatprep.subr.bf16.mxu0 0
    %1724 = vmatpush1.bf16.msra.mxu0 0
    %1725 = vmatprep.subr.bf16.mxu0 0
    %1726 = vmatpush1.bf16.msra.mxu0 0
    %1727 = vmatprep.subr.bf16.mxu0 0
    %1728 = vmatpush1.bf16.msra.mxu0 0
    %1729 = vmatprep.subr.bf16.mxu0 0
    %1730 = vmatpush1.bf16.msra.mxu0 0
    %1731 = vmatprep.subr.bf16.mxu0 0
    %1732 = vmatpush1.bf16.msra.mxu0 %v1209
    %1733 = vmatprep.subr.bf16.mxu0 0
    %1734 = vmatpush1.bf16.msra.mxu0 %v1208
    %1735 = vmatprep.subr.bf16.mxu0 0
    %1736 = vmatpush1.bf16.msra.mxu0 %v1207
    %1737 = vmatprep.subr.bf16.mxu0 0
    %1738 = vmatpush2.bf16.msra.mxu0 0
    %1739 = vmatprep.subr.bf16.mxu0 0
    %1740 = vmatpush2.bf16.msra.mxu0 0
    %1741 = vmatprep.subr.bf16.mxu0 0
    %1742 = vmatpush2.bf16.msra.mxu0 0
    %1743 = vmatprep.subr.bf16.mxu0 0
    %1744 = vmatpush2.bf16.msra.mxu0 0
    %1745 = vmatprep.subr.bf16.mxu0 0
    %1746 = vmatpush2.bf16.msra.mxu0 0
    %1747 = vmatprep.subr.bf16.mxu0 0
    %1748 = vmatpush2.bf16.msra.mxu0 0
    %1749 = vmatprep.subr.bf16.mxu0 0
    %1750 = vmatpush2.bf16.msra.mxu0 0
    %1751 = vmatprep.subr.bf16.mxu0 0
    %1752 = vmatpush2.bf16.msra.mxu0 0
    %1753 = vmatprep.mubr.bf16.mxu0 0
    %1754 = vmatmul.mubr.bf16.gmra.mxu0 %v1359
    %v1755 = vpop.f32.mrf.mxu0
    %v1756 = vadd.f32 %v1716, %v1755
    %v1757 = vpop.f32.mrf.mxu0
    %v1758 = vpop.f32.mrf.mxu0
    %v1759 = vpop.f32.mrf.mxu0
    %1760 = vdwg.mxu0
    %v1761 = vmax.f32 %v1756, 0.0
    %v1762 = vpack.c.bf16 %v1761, %v1761
    %v1763 = vld [vmem:[%s3] sm:$0xf]
    %v1764 = vld [vmem:[%s3 + $0x4] sm:$0xf]
    %v1765 = vld [vmem:[%s3 + $0x8] sm:$0xf]
    %v1766 = vld [vmem:[%s3 + $0xc] sm:$0xf]
    %v1767 = vld [vmem:[%s3 + $0x10] sm:$0xf]
    %v1768 = vld [vmem:[%s3 + $0x14] sm:$0xf]
    %v1769 = vld [vmem:[%s3 + $0x18] sm:$0xf]
    %v1770 = vld [vmem:[%s3 + $0x1c] sm:$0xf]
    %v1771 = vld [vmem:[%s3 + $0x20] sm:$0xf]
    %v1772 = vld [vmem:[%s3 + $0x24] sm:$0xf]
    %v1773 = vld [vmem:[%s3 + $0x28] sm:$0xf]
    %v1774 = vld [vmem:[%s3 + $0x2c] sm:$0xf]
    %v1775 = vld [vmem:[%s3 + $0x30] sm:$0xf]
    %v1776 = vld [vmem:[%s3 + $0x34] sm:$0xf]
    %v1777 = vld [vmem:[%s3 + $0x38] sm:$0xf]
    %v1778 = vld [vmem:[%s3 + $0x3c] sm:$0xf]
    %v1779 = vld [vmem:[%s4] sm:$0x1]
    %v1781 = vlaneseq
    %v1782 = vshrl.u32 %v1781, 7
    %v1783 = vsub.s32 0, %v1782
    %v1784 = vrot.slane %v1779, %v1783
    %v1802 = vunpack.c.l.b16 %v1763
    %v1803 = vunpack.c.l.b16 %v1764
    %v1804 = vunpack.c.l.b16 %v1765
    %v1805 = vunpack.c.l.b16 %v1766
    %v1806 = vunpack.c.l.b16 %v1767
    %v1807 = vunpack.c.l.b16 %v1768
    %v1808 = vunpack.c.l.b16 %v1769
    %v1809 = vunpack.c.l.b16 %v1770
    %v1810 = vunpack.c.l.b16 %v1771
    %v1811 = vunpack.c.l.b16 %v1772
    %v1812 = vunpack.c.l.b16 %v1773
    %v1813 = vunpack.c.l.b16 %v1774
    %v1814 = vunpack.c.l.b16 %v1775
    %v1815 = vunpack.c.l.b16 %v1776
    %v1816 = vunpack.c.l.b16 %v1777
    %v1817 = vunpack.c.l.b16 %v1778
    %v1818 = vpack.c.b16 %v1803, %v1802
    %v1819 = vpack.c.b16 %v1805, %v1804
    %v1820 = vpack.c.b16 %v1807, %v1806
    %v1821 = vpack.c.b16 %v1809, %v1808
    %v1822 = vpack.c.b16 %v1811, %v1810
    %v1823 = vpack.c.b16 %v1813, %v1812
    %v1824 = vpack.c.b16 %v1815, %v1814
    %v1825 = vpack.c.b16 %v1817, %v1816
    %1834 = vmatprep.subr.bf16.mxu0 0
    %1835 = vmatpush1.bf16.msra.mxu0 %v1825
    %1836 = vmatprep.subr.bf16.mxu0 0
    %1837 = vmatpush1.bf16.msra.mxu0 %v1824
    %1838 = vmatprep.subr.bf16.mxu0 0
    %1839 = vmatpush1.bf16.msra.mxu0 %v1823
    %1840 = vmatprep.subr.bf16.mxu0 0
    %1841 = vmatpush1.bf16.msra.mxu0 %v1822
    %1842 = vmatprep.subr.bf16.mxu0 0
    %1843 = vmatpush1.bf16.msra.mxu0 %v1821
    %1844 = vmatprep.subr.bf16.mxu0 0
    %1845 = vmatpush1.bf16.msra.mxu0 %v1820
    %1846 = vmatprep.subr.bf16.mxu0 0
    %1847 = vmatpush1.bf16.msra.mxu0 %v1819
    %1848 = vmatprep.subr.bf16.mxu0 0
    %1849 = vmatpush1.bf16.msra.mxu0 %v1818
    %1850 = vmatprep.subr.bf16.mxu0 0
    %1851 = vmatpush2.bf16.msra.mxu0 0
    %1852 = vmatprep.subr.bf16.mxu0 0
    %1853 = vmatpush2.bf16.msra.mxu0 0
    %1854 = vmatprep.subr.bf16.mxu0 0
    %1855 = vmatpush2.bf16.msra.mxu0 0
    %1856 = vmatprep.subr.bf16.mxu0 0
    %1857 = vmatpush2.bf16.msra.mxu0 0
    %1858 = vmatprep.subr.bf16.mxu0 0
    %1859 = vmatpush2.bf16.msra.mxu0 0
    %1860 = vmatprep.subr.bf16.mxu0 0
    %1861 = vmatpush2.bf16.msra.mxu0 0
    %1862 = vmatprep.subr.bf16.mxu0 0
    %1863 = vmatpush2.bf16.msra.mxu0 0
    %1864 = vmatprep.subr.bf16.mxu0 0
    %1865 = vmatpush2.bf16.msra.mxu0 0
    %1866 = vmatprep.mubr.bf16.mxu0 0
    %1867 = vmatmul.mubr.bf16.gmra.mxu0 %v1762
    %v1868 = vpop.f32.mrf.mxu0
    %v1869 = vadd.f32 %v1784, %v1868
    %v1870 = vpop.f32.mrf.mxu0
    %v1871 = vpop.f32.mrf.mxu0
    %v1872 = vpop.f32.mrf.mxu0
    %1873 = vdwg.mxu0
    %v1874 = vmax.f32 %v1869, 0.0
    %v1875 = vpack.c.bf16 %v1874, %v1874
    %v1876 = vld [vmem:[%s5] sm:$0xf]
    %v1877 = vld [vmem:[%s5 + $0x4] sm:$0xf]
    %v1878 = vld [vmem:[%s5 + $0x8] sm:$0xf]
    %v1879 = vld [vmem:[%s5 + $0xc] sm:$0xf]
    %v1880 = vld [vmem:[%s5 + $0x10] sm:$0xf]
    %v1881 = vld [vmem:[%s5 + $0x14] sm:$0xf]
    %v1882 = vld [vmem:[%s5 + $0x18] sm:$0xf]
    %v1883 = vld [vmem:[%s5 + $0x1c] sm:$0xf]
    %v1884 = vld [vmem:[%s6] sm:$0x1]
    %v1886 = vlaneseq
    %v1887 = vshrl.u32 %v1886, 7
    %v1888 = vsub.s32 0, %v1887
    %v1889 = vrot.slane %v1884, %v1888
    %v1899 = vunpack.c.l.b16 %v1876
    %v1900 = vunpack.c.l.b16 %v1877
    %v1901 = vunpack.c.l.b16 %v1878
    %v1902 = vunpack.c.l.b16 %v1879
    %v1903 = vunpack.c.l.b16 %v1880
    %v1904 = vunpack.c.l.b16 %v1881
    %v1905 = vunpack.c.l.b16 %v1882
    %v1906 = vunpack.c.l.b16 %v1883
    %v1907 = vpack.c.b16 %v1900, %v1899
    %v1908 = vpack.c.b16 %v1902, %v1901
    %v1909 = vpack.c.b16 %v1904, %v1903
    %v1910 = vpack.c.b16 %v1906, %v1905
    %vm1915 = vcmask 523264
    %v1917 = vsel %vm1915, %v1875, 0
    %1919 = vmatprep.subr.bf16.mxu0 0
    %1920 = vmatpush1.bf16.msra.mxu0 0
    %1921 = vmatprep.subr.bf16.mxu0 0
    %1922 = vmatpush1.bf16.msra.mxu0 0
    %1923 = vmatprep.subr.bf16.mxu0 0
    %1924 = vmatpush1.bf16.msra.mxu0 0
    %1925 = vmatprep.subr.bf16.mxu0 0
    %1926 = vmatpush1.bf16.msra.mxu0 0
    %1927 = vmatprep.subr.bf16.mxu0 0
    %1928 = vmatpush1.bf16.msra.mxu0 %v1910
    %1929 = vmatprep.subr.bf16.mxu0 0
    %1930 = vmatpush1.bf16.msra.mxu0 %v1909
    %1931 = vmatprep.subr.bf16.mxu0 0
    %1932 = vmatpush1.bf16.msra.mxu0 %v1908
    %1933 = vmatprep.subr.bf16.mxu0 0
    %1934 = vmatpush1.bf16.msra.mxu0 %v1907
    %1935 = vmatprep.subr.bf16.mxu0 0
    %1936 = vmatpush2.bf16.msra.mxu0 0
    %1937 = vmatprep.subr.bf16.mxu0 0
    %1938 = vmatpush2.bf16.msra.mxu0 0
    %1939 = vmatprep.subr.bf16.mxu0 0
    %1940 = vmatpush2.bf16.msra.mxu0 0
    %1941 = vmatprep.subr.bf16.mxu0 0
    %1942 = vmatpush2.bf16.msra.mxu0 0
    %1943 = vmatprep.subr.bf16.mxu0 0
    %1944 = vmatpush2.bf16.msra.mxu0 0
    %1945 = vmatprep.subr.bf16.mxu0 0
    %1946 = vmatpush2.bf16.msra.mxu0 0
    %1947 = vmatprep.subr.bf16.mxu0 0
    %1948 = vmatpush2.bf16.msra.mxu0 0
    %1949 = vmatprep.subr.bf16.mxu0 0
    %1950 = vmatpush2.bf16.msra.mxu0 0
    %1951 = vmatprep.mubr.bf16.mxu0 0
    %1952 = vmatmul.mubr.bf16.gmra.mxu0 %v1917
    %v1953 = vpop.f32.mrf.mxu0
    %v1954 = vadd.f32 %v1889, %v1953
    %v1955 = vpop.f32.mrf.mxu0
    %v1956 = vpop.f32.mrf.mxu0
    %v1957 = vpop.f32.mrf.mxu0
    %1958 = vdwg.mxu0
    %1959 = vst [vmem:[#allocation5] sm:$0x3] %v1954
    // Predicated region
    $region34: #{tpu_custom_call.1} parent=1 // pred_check
      _
    $region35: #{tpu_custom_call.1} parent=1 // pred_check_branch
      %1961 = sbr.rel (0) target = $region37
    $region36: #{tpu_custom_call.1} parent=1 // pred_region
      %s1963 = ssub.s32 32, 32
      %1964 = vsyncadd [#allocation4], %s1963
      %s1966 = sshll.u32 [#allocation5], 4
      %s1967 = int_to_ptr.vmem [resolvable:$true] %s1966
      %1969 = dma.vmem_to_hbm [thread:$0]  %s1967, 32, %s7, [#allocation4]
    $region37: #{tpu_custom_call.1} parent=1 // pred_fallthru
      _
    // Predicated region
    $region38: #{tpu_custom_call.1} parent=1 // pred_check
      _
    $region39: #{tpu_custom_call.1} parent=1 // pred_check_branch
      %1971 = sbr.rel (0) target = $region41
    $region40: #{tpu_custom_call.1} parent=1 // pred_region
      %1972 = dma.done [#allocation4], 32
    $region41: #{tpu_custom_call.1} parent=1 // pred_fallthru
      _
    %1973 = vsyncpa [#allocation3], 1
    %1974 = vsyncpa [#allocation4], 1

</llo_original>
